<compile_context>
chip_gen: v6e
topology: v6e:2x2x1
jax: 0.10.0
libtpu: 0.0.40
codegen_flags: <defaults>
</compile_context>

<pallas_src>
import jax
import jax.numpy as jnp
from jax.experimental import pallas as pl
from jax.experimental.pallas import tpu as pltpu


# --------------------------------------------------------------------------- #
# Kernel 1: fused per-point MLP (1x1 convs 3->16->32->64) + global max-pool.
#   grid = (B, num_point_tiles); batch axis is "parallel" (megacore on v7x),
#   point-tile axis is "arbitrary" (carries the running-max accumulator).
# --------------------------------------------------------------------------- #
def _encoder_kernel(x_ref, w1_ref, b1_ref, w2_ref, b2_ref, w3_ref, b3_ref,
                    g_ref, acc_ref):
    j = pl.program_id(1)

    @pl.when(j == 0)
    def _init():
        acc_ref[...] = jnp.full(acc_ref.shape, -jnp.inf, acc_ref.dtype)

    x = x_ref[0]                                            # (3, tile_n), points on lanes
    h = jnp.dot(w1_ref[...], x, preferred_element_type=jnp.float32) + b1_ref[...]
    h = jnp.maximum(h, 0.0)
    h = jnp.dot(w2_ref[...], h, preferred_element_type=jnp.float32) + b2_ref[...]
    h = jnp.maximum(h, 0.0)
    h = jnp.dot(w3_ref[...], h, preferred_element_type=jnp.float32) + b3_ref[...]
    h = jnp.maximum(h, 0.0)                                 # (64, tile_n)

    # running max over the point (lane) axis
    acc_ref[...] = jnp.maximum(acc_ref[...], jnp.max(h, axis=1, keepdims=True))

    @pl.when(j == pl.num_programs(1) - 1)
    def _write():
        g_ref[...] = acc_ref[...].reshape(g_ref.shape)      # (1, 64, 1)


def _pick_point_tile(n):
    # Largest 128-aligned tile that divides N (keeps lane-dense, pipelined tiles
    # and stays far below the 32 MiB scoped-VMEM budget on v7x); toy sizes fall
    # back to a single full-extent tile.
    for t in (2048, 1024, 512, 256, 128):
        if n % t == 0:
            return t
    return n


def encode_points(x, enc_conv):
    """x: (B, 3, N) NCW -> global feature (B, 64).  One fused pallas_call."""
    B, C, N = x.shape
    (w1, b1), (w2, b2), (w3, b3) = enc_conv
    c_out = w3.shape[0]
    tile_n = _pick_point_tile(N)
    grid = (B, N // tile_n)

    def _const(shape):                      # weight/bias resident in VMEM
        return pl.BlockSpec(shape, lambda b, j: (0, 0))

    g = pl.pallas_call(
        _encoder_kernel,
        out_shape=jax.ShapeDtypeStruct((B, c_out, 1), jnp.float32),
        grid=grid,
        in_specs=[
            pl.BlockSpec((1, C, tile_n), lambda b, j: (b, 0, j)),
            _const(w1.shape), _const(b1.shape),
            _const(w2.shape), _const(b2.shape),
            _const(w3.shape), _const(b3.shape),
        ],
        out_specs=pl.BlockSpec((1, c_out, 1), lambda b, j: (b, 0, 0)),
        scratch_shapes=[pltpu.VMEM((c_out, 1), jnp.float32)],
        compiler_params=pltpu.CompilerParams(
            dimension_semantics=("parallel", "arbitrary")),
    )(x, w1, b1, w2, b2, w3, b3)
    return g.reshape(B, c_out)


# --------------------------------------------------------------------------- #
# Kernel 2: fused FC head (64->32->2E) + both PointGen decoders (E->32->64->3P)
#   Single launch, all operands resident in VMEM (everything is tiny post-pool).
# --------------------------------------------------------------------------- #
def _head_kernel(g_ref,
                 fw1, fb1, fw2a, fb2a, fw2b, fb2b,
                 d1w1, d1b1, d1w2, d1b2, d1w3, d1b3,
                 d2w1, d2b1, d2w2, d2b2, d2w3, d2b3,
                 y1_ref, y2_ref):
    def mm(a, w_ref, b_ref, relu):
        y = jnp.dot(a, w_ref[...], preferred_element_type=jnp.float32) + b_ref[...]
        return jnp.maximum(y, 0.0) if relu else y

    g = g_ref[...]                                          # (B, 64)
    h = mm(g, fw1, fb1, relu=True)                          # (B, 32)
    h1 = mm(h, fw2a, fb2a, relu=False)                      # (B, E)   code half 1
    h2 = mm(h, fw2b, fb2b, relu=False)                      # (B, E)   code half 2

    t = mm(h1, d1w1, d1b1, relu=True)
    t = mm(t, d1w2, d1b2, relu=True)
    y1_ref[...] = mm(t, d1w3, d1b3, relu=False)             # (B, dim_part*3)

    t = mm(h2, d2w1, d2b1, relu=True)
    t = mm(t, d2w2, d2b2, relu=True)
    y2_ref[...] = mm(t, d2w3, d2b3, relu=False)             # (B, dim_part*3)


def head_and_decode(g, params, dim_embed, dim_part):
    B = g.shape[0]
    (fw1, fb1), (fw2, fb2) = params["enc_fc"]
    # split the 2E head into two E-wide heads outside the kernel (no in-kernel
    # lane-offset slicing needed)
    fw2a, fw2b = fw2[:, :dim_embed], fw2[:, dim_embed:]
    fb2a, fb2b = fb2[:, :dim_embed], fb2[:, dim_embed:]
    d1, d2 = params["dec1"], params["dec2"]

    out_shape = (jax.ShapeDtypeStruct((B, dim_part * 3), jnp.float32),
                 jax.ShapeDtypeStruct((B, dim_part * 3), jnp.float32))
    y1f, y2f = pl.pallas_call(_head_kernel, out_shape=out_shape)(
        g, fw1, fb1, fw2a, fb2a, fw2b, fb2b,
        d1[0][0], d1[0][1], d1[1][0], d1[1][1], d1[2][0], d1[2][1],
        d2[0][0], d2[0][1], d2[1][0], d2[1][1], d2[2][0], d2[2][1])
    return y1f, y2f


# ------------------------------ parameters --------------------------------- #

def _init_cf(key, c_in, c_out):
    """Channels-first: W (C_out, C_in), bias (C_out, 1) — for the point MLP."""
    kw, kb = jax.random.split(key)
    w = jax.random.normal(kw, (c_out, c_in), jnp.float32) / jnp.sqrt(jnp.float32(c_in))
    b = 0.01 * jax.random.normal(kb, (c_out, 1), jnp.float32)
    return w, b


def _init_rm(key, c_in, c_out):
    """Row-major: W (C_in, C_out), bias (1, C_out) — for FC head / decoders."""
    kw, kb = jax.random.split(key)
    w = jax.random.normal(kw, (c_in, c_out), jnp.float32) / jnp.sqrt(jnp.float32(c_in))
    b = 0.01 * jax.random.normal(kb, (1, c_out), jnp.float32)
    return w, b


def init_params(key, dim_input, dim_embed):
    dim_part = dim_input // 2
    enc_conv_dims = [(3, 16), (16, 32), (32, 64)]                  # per-point MLP
    enc_fc_dims = [(64, 32), (32, 2 * dim_embed)]                  # FC head
    dec_dims = [(dim_embed, 32), (32, 64), (64, dim_part * 3)]     # PointGen
    n = len(enc_conv_dims) + len(enc_fc_dims) + 2 * len(dec_dims)
    keys = iter(jax.random.split(key, n))
    return {
        "enc_conv": [_init_cf(next(keys), *d) for d in enc_conv_dims],
        "enc_fc": [_init_rm(next(keys), *d) for d in enc_fc_dims],
        "dec1": [_init_rm(next(keys), *d) for d in dec_dims],
        "dec2": [_init_rm(next(keys), *d) for d in dec_dims],
    }


# ------------------------------- forward ----------------------------------- #

def ae2_forward(x, params, dim_embed, dim_input):
    """x: (B, 3, N) NCW. Returns (x_hat (B, N, 3), (y1 (B, N/2, 3), y2 (B, N/2, 3)))."""
    B = x.shape[0]
    dim_part = dim_input // 2

    # encode: fused per-point MLP + global max-pool (1 kernel launch)
    g = encode_points(x, params["enc_conv"])                        # (B, 64)

    # FC head + both decoders (1 kernel launch)
    y1f, y2f = head_and_decode(g, params, dim_embed, dim_part)      # (B, dim_part*3) x2

    # torch: .view(B, 3, -1).permute(0, 2, 1)  -> (B, dim_part, 3)
    y1 = jnp.transpose(y1f.reshape(B, 3, dim_part), (0, 2, 1))
    y2 = jnp.transpose(y2f.reshape(B, 3, dim_part), (0, 2, 1))

    # translate: concat along the point axis
    x_hat = jnp.concatenate([y1, y2], axis=1)                       # (B, dim_input, 3)
    return x_hat, (y1, y2)


# --------------------------------- main ------------------------------------ #

if __name__ == "__main__":
    B = 2
    dim_input = 16    # number of points (small synthetic size)
    dim_embed = 8

    key = jax.random.PRNGKey(0)
    kx, kp = jax.random.split(key)
    x = jax.random.normal(kx, (B, 3, dim_input), dtype=jnp.float32)
    params = init_params(kp, dim_input, dim_embed)

    fwd = jax.jit(lambda inp: ae2_forward(inp, params, dim_embed, dim_input))
    x_hat, (y1, y2) = fwd(x)
    jax.block_until_ready(x_hat)

    assert x_hat.shape == (B, dim_input, 3)
    assert y1.shape == (B, dim_input // 2, 3)
    assert y2.shape == (B, dim_input // 2, 3)
    assert bool(jnp.all(jnp.isfinite(x_hat)))
    print("KERNEL_OK")
</pallas_src>

<mosaic_0001>
module attributes {stable_mosaic.version = 11 : i64} {
  func.func @_encoder_kernel(%arg0: i32, %arg1: i32, %arg2: memref<1x3x16xf32, #tpu.memory_space<vmem>>, %arg3: memref<16x3xf32, #tpu.memory_space<vmem>>, %arg4: memref<16x1xf32, #tpu.memory_space<vmem>>, %arg5: memref<32x16xf32, #tpu.memory_space<vmem>>, %arg6: memref<32x1xf32, #tpu.memory_space<vmem>>, %arg7: memref<64x32xf32, #tpu.memory_space<vmem>>, %arg8: memref<64x1xf32, #tpu.memory_space<vmem>>, %arg9: memref<1x64x1xf32, #tpu.memory_space<vmem>>, %arg10: memref<64x1xf32, #tpu.memory_space<vmem>>) attributes {dimension_semantics = [#tpu.dimension_semantics<parallel>, #tpu.dimension_semantics<arbitrary>], iteration_bounds = array<i64: 2, 1>, scalar_prefetch = 0 : i64, scratch_operands = 1 : i64, tpu.core_type = #tpu.core_type<tc>, window_params = [{transform_indices = @transform_0, window_bounds = array<i64: 1, 3, 16>}, {pipeline_mode = #tpu.pipeline_mode<synchronous>, transform_indices = @transform_1, window_bounds = array<i64: 16, 3>}, {pipeline_mode = #tpu.pipeline_mode<synchronous>, transform_indices = @transform_2, window_bounds = array<i64: 16, 1>}, {pipeline_mode = #tpu.pipeline_mode<synchronous>, transform_indices = @transform_3, window_bounds = array<i64: 32, 16>}, {pipeline_mode = #tpu.pipeline_mode<synchronous>, transform_indices = @transform_4, window_bounds = array<i64: 32, 1>}, {pipeline_mode = #tpu.pipeline_mode<synchronous>, transform_indices = @transform_5, window_bounds = array<i64: 64, 32>}, {pipeline_mode = #tpu.pipeline_mode<synchronous>, transform_indices = @transform_6, window_bounds = array<i64: 64, 1>}, {transform_indices = @transform_7, window_bounds = array<i64: 1, 64, 1>}]} {
    %c0_i32 = arith.constant 0 : i32
    %0 = arith.cmpi eq, %arg1, %c0_i32 : i32
    %1 = arith.extui %0 : i1 to i32
    %c0_i32_0 = arith.constant 0 : i32
    %2 = arith.cmpi ne, %1, %c0_i32_0 : i32
    scf.if %2 {
      %cst_27 = arith.constant 0xFF800000 : f32
      %34 = vector.broadcast %cst_27 : f32 to vector<64x1xf32>
      %c0_28 = arith.constant 0 : index
      %c0_29 = arith.constant 0 : index
      %35 = vector.load %arg10[%c0_28, %c0_29] : memref<64x1xf32, #tpu.memory_space<vmem>>, vector<64x1xf32>
      tpu.vector_store %arg10[%c0_28, %c0_29], %34 {strides = array<i32>} : memref<64x1xf32, #tpu.memory_space<vmem>>, vector<64x1xf32>,
    } else {
    }
    %c0 = arith.constant 0 : index
    %c0_1 = arith.constant 0 : index
    %c0_2 = arith.constant 0 : index
    %3 = vector.load %arg2[%c0, %c0_1, %c0_2] : memref<1x3x16xf32, #tpu.memory_space<vmem>>, vector<1x3x16xf32>
    %4 = vector.shape_cast %3 : vector<1x3x16xf32> to vector<3x16xf32>
    %c0_3 = arith.constant 0 : index
    %c0_4 = arith.constant 0 : index
    %5 = vector.load %arg3[%c0_3, %c0_4] : memref<16x3xf32, #tpu.memory_space<vmem>>, vector<16x3xf32>
    %cst = arith.constant dense<0.000000e+00> : vector<16x16xf32>
    %6 = tpu.matmul %5, %4, %cst {dimension_numbers = #tpu.dot_dimension_numbers<[1], [0], [0], [1], [0, 0, 1, 1], [], []>} : vector<16x3xf32>, vector<3x16xf32>, vector<16x16xf32> -> vector<16x16xf32>
    %c0_5 = arith.constant 0 : index
    %c0_6 = arith.constant 0 : index
    %7 = vector.load %arg4[%c0_5, %c0_6] : memref<16x1xf32, #tpu.memory_space<vmem>>, vector<16x1xf32>
    %8 = vector.broadcast %7 : vector<16x1xf32> to vector<16x16xf32>
    %9 = arith.addf %6, %8 : vector<16x16xf32>
    %cst_7 = arith.constant 0.000000e+00 : f32
    %10 = vector.broadcast %cst_7 : f32 to vector<16x16xf32>
    %11 = arith.maximumf %9, %10 : vector<16x16xf32>
    %c0_8 = arith.constant 0 : index
    %c0_9 = arith.constant 0 : index
    %12 = vector.load %arg5[%c0_8, %c0_9] : memref<32x16xf32, #tpu.memory_space<vmem>>, vector<32x16xf32>
    %cst_10 = arith.constant dense<0.000000e+00> : vector<32x16xf32>
    %13 = tpu.matmul %12, %11, %cst_10 {dimension_numbers = #tpu.dot_dimension_numbers<[1], [0], [0], [1], [0, 0, 1, 1], [], []>} : vector<32x16xf32>, vector<16x16xf32>, vector<32x16xf32> -> vector<32x16xf32>
    %c0_11 = arith.constant 0 : index
    %c0_12 = arith.constant 0 : index
    %14 = vector.load %arg6[%c0_11, %c0_12] : memref<32x1xf32, #tpu.memory_space<vmem>>, vector<32x1xf32>
    %15 = vector.broadcast %14 : vector<32x1xf32> to vector<32x16xf32>
    %16 = arith.addf %13, %15 : vector<32x16xf32>
    %cst_13 = arith.constant 0.000000e+00 : f32
    %17 = vector.broadcast %cst_13 : f32 to vector<32x16xf32>
    %18 = arith.maximumf %16, %17 : vector<32x16xf32>
    %c0_14 = arith.constant 0 : index
    %c0_15 = arith.constant 0 : index
    %19 = vector.load %arg7[%c0_14, %c0_15] : memref<64x32xf32, #tpu.memory_space<vmem>>, vector<64x32xf32>
    %cst_16 = arith.constant dense<0.000000e+00> : vector<64x16xf32>
    %20 = tpu.matmul %19, %18, %cst_16 {dimension_numbers = #tpu.dot_dimension_numbers<[1], [0], [0], [1], [0, 0, 1, 1], [], []>} : vector<64x32xf32>, vector<32x16xf32>, vector<64x16xf32> -> vector<64x16xf32>
    %c0_17 = arith.constant 0 : index
    %c0_18 = arith.constant 0 : index
    %21 = vector.load %arg8[%c0_17, %c0_18] : memref<64x1xf32, #tpu.memory_space<vmem>>, vector<64x1xf32>
    %22 = vector.broadcast %21 : vector<64x1xf32> to vector<64x16xf32>
    %23 = arith.addf %20, %22 : vector<64x16xf32>
    %cst_19 = arith.constant 0.000000e+00 : f32
    %24 = vector.broadcast %cst_19 : f32 to vector<64x16xf32>
    %25 = arith.maximumf %23, %24 : vector<64x16xf32>
    %c0_20 = arith.constant 0 : index
    %c0_21 = arith.constant 0 : index
    %26 = vector.load %arg10[%c0_20, %c0_21] : memref<64x1xf32, #tpu.memory_space<vmem>>, vector<64x1xf32>
    %cst_22 = arith.constant dense<0xFF800000> : vector<64xf32>
    %27 = vector.multi_reduction <maximumf>, %25, %cst_22 [1] : vector<64x16xf32> to vector<64xf32>
    %28 = vector.shape_cast %27 : vector<64xf32> to vector<64x1xf32>
    %29 = arith.maximumf %26, %28 : vector<64x1xf32>
    %c0_23 = arith.constant 0 : index
    %c0_24 = arith.constant 0 : index
    %30 = vector.load %arg10[%c0_23, %c0_24] : memref<64x1xf32, #tpu.memory_space<vmem>>, vector<64x1xf32>
    tpu.vector_store %arg10[%c0_23, %c0_24], %29 {strides = array<i32>} : memref<64x1xf32, #tpu.memory_space<vmem>>, vector<64x1xf32>,
    %c0_i32_25 = arith.constant 0 : i32
    %31 = arith.cmpi eq, %arg1, %c0_i32_25 : i32
    %32 = arith.extui %31 : i1 to i32
    %c0_i32_26 = arith.constant 0 : i32
    %33 = arith.cmpi ne, %32, %c0_i32_26 : i32
    scf.if %33 {
      %c0_27 = arith.constant 0 : index
      %c0_28 = arith.constant 0 : index
      %34 = vector.load %arg10[%c0_27, %c0_28] : memref<64x1xf32, #tpu.memory_space<vmem>>, vector<64x1xf32>
      %35 = vector.shape_cast %34 : vector<64x1xf32> to vector<1x64x1xf32>
      %c0_29 = arith.constant 0 : index
      %c0_30 = arith.constant 0 : index
      %c0_31 = arith.constant 0 : index
      %36 = vector.load %arg9[%c0_29, %c0_30, %c0_31] : memref<1x64x1xf32, #tpu.memory_space<vmem>>, vector<1x64x1xf32>
      tpu.vector_store %arg9[%c0_29, %c0_30, %c0_31], %35 {strides = array<i32>} : memref<1x64x1xf32, #tpu.memory_space<vmem>>, vector<1x64x1xf32>,
    } else {
    }
    return
  }
  func.func @transform_0(%arg0: i32, %arg1: i32) -> (i32, i32, i32) {
    %c0_i32 = arith.constant 0 : i32
    %c0_i32_0 = arith.constant 0 : i32
    return %arg0, %c0_i32, %arg1 : i32, i32, i32
  }
  func.func @transform_1(%arg0: i32, %arg1: i32) -> (i32, i32) {
    %c0_i32 = arith.constant 0 : i32
    %c0_i32_0 = arith.constant 0 : i32
    %c0_i32_1 = arith.constant 0 : i32
    return %c0_i32, %c0_i32_0 : i32, i32
  }
  func.func @transform_2(%arg0: i32, %arg1: i32) -> (i32, i32) {
    %c0_i32 = arith.constant 0 : i32
    %c0_i32_0 = arith.constant 0 : i32
    %c0_i32_1 = arith.constant 0 : i32
    return %c0_i32, %c0_i32_0 : i32, i32
  }
  func.func @transform_3(%arg0: i32, %arg1: i32) -> (i32, i32) {
    %c0_i32 = arith.constant 0 : i32
    %c0_i32_0 = arith.constant 0 : i32
    %c0_i32_1 = arith.constant 0 : i32
    return %c0_i32, %c0_i32_0 : i32, i32
  }
  func.func @transform_4(%arg0: i32, %arg1: i32) -> (i32, i32) {
    %c0_i32 = arith.constant 0 : i32
    %c0_i32_0 = arith.constant 0 : i32
    %c0_i32_1 = arith.constant 0 : i32
    return %c0_i32, %c0_i32_0 : i32, i32
  }
  func.func @transform_5(%arg0: i32, %arg1: i32) -> (i32, i32) {
    %c0_i32 = arith.constant 0 : i32
    %c0_i32_0 = arith.constant 0 : i32
    %c0_i32_1 = arith.constant 0 : i32
    return %c0_i32, %c0_i32_0 : i32, i32
  }
  func.func @transform_6(%arg0: i32, %arg1: i32) -> (i32, i32) {
    %c0_i32 = arith.constant 0 : i32
    %c0_i32_0 = arith.constant 0 : i32
    %c0_i32_1 = arith.constant 0 : i32
    return %c0_i32, %c0_i32_0 : i32, i32
  }
  func.func @transform_7(%arg0: i32, %arg1: i32) -> (i32, i32, i32) {
    %c0_i32 = arith.constant 0 : i32
    %c0_i32_0 = arith.constant 0 : i32
    %c0_i32_1 = arith.constant 0 : i32
    return %arg0, %c0_i32, %c0_i32_0 : i32, i32, i32
  }
}

module attributes {stable_mosaic.version = 11 : i64} {
  func.func @_head_kernel(%arg0: memref<2x64xf32, #tpu.memory_space<vmem>>, %arg1: memref<64x32xf32, #tpu.memory_space<vmem>>, %arg2: memref<1x32xf32, #tpu.memory_space<vmem>>, %arg3: memref<32x8xf32, #tpu.memory_space<vmem>>, %arg4: memref<1x8xf32, #tpu.memory_space<vmem>>, %arg5: memref<32x8xf32, #tpu.memory_space<vmem>>, %arg6: memref<1x8xf32, #tpu.memory_space<vmem>>, %arg7: memref<8x32xf32, #tpu.memory_space<vmem>>, %arg8: memref<1x32xf32, #tpu.memory_space<vmem>>, %arg9: memref<32x64xf32, #tpu.memory_space<vmem>>, %arg10: memref<1x64xf32, #tpu.memory_space<vmem>>, %arg11: memref<64x24xf32, #tpu.memory_space<vmem>>, %arg12: memref<1x24xf32, #tpu.memory_space<vmem>>, %arg13: memref<8x32xf32, #tpu.memory_space<vmem>>, %arg14: memref<1x32xf32, #tpu.memory_space<vmem>>, %arg15: memref<32x64xf32, #tpu.memory_space<vmem>>, %arg16: memref<1x64xf32, #tpu.memory_space<vmem>>, %arg17: memref<64x24xf32, #tpu.memory_space<vmem>>, %arg18: memref<1x24xf32, #tpu.memory_space<vmem>>, %arg19: memref<2x24xf32, #tpu.memory_space<vmem>>, %arg20: memref<2x24xf32, #tpu.memory_space<vmem>>) attributes {dimension_semantics = [], scalar_prefetch = 0 : i64, scratch_operands = 0 : i64, tpu.core_type = #tpu.core_type<tc>} {
    %c0 = arith.constant 0 : index
    %c0_0 = arith.constant 0 : index
    %0 = vector.load %arg0[%c0, %c0_0] : memref<2x64xf32, #tpu.memory_space<vmem>>, vector<2x64xf32>
    %c0_1 = arith.constant 0 : index
    %c0_2 = arith.constant 0 : index
    %1 = vector.load %arg1[%c0_1, %c0_2] : memref<64x32xf32, #tpu.memory_space<vmem>>, vector<64x32xf32>
    %cst = arith.constant dense<0.000000e+00> : vector<2x32xf32>
    %2 = tpu.matmul %0, %1, %cst {dimension_numbers = #tpu.dot_dimension_numbers<[1], [0], [0], [1], [0, 0, 1, 1], [], []>} : vector<2x64xf32>, vector<64x32xf32>, vector<2x32xf32> -> vector<2x32xf32>
    %c0_3 = arith.constant 0 : index
    %c0_4 = arith.constant 0 : index
    %3 = vector.load %arg2[%c0_3, %c0_4] : memref<1x32xf32, #tpu.memory_space<vmem>>, vector<1x32xf32>
    %4 = vector.broadcast %3 : vector<1x32xf32> to vector<2x32xf32>
    %5 = arith.addf %2, %4 : vector<2x32xf32>
    %cst_5 = arith.constant 0.000000e+00 : f32
    %6 = vector.broadcast %cst_5 : f32 to vector<2x32xf32>
    %7 = arith.maximumf %5, %6 : vector<2x32xf32>
    %c0_6 = arith.constant 0 : index
    %c0_7 = arith.constant 0 : index
    %8 = vector.load %arg3[%c0_6, %c0_7] : memref<32x8xf32, #tpu.memory_space<vmem>>, vector<32x8xf32>
    %cst_8 = arith.constant dense<0.000000e+00> : vector<2x8xf32>
    %9 = tpu.matmul %7, %8, %cst_8 {dimension_numbers = #tpu.dot_dimension_numbers<[1], [0], [0], [1], [0, 0, 1, 1], [], []>} : vector<2x32xf32>, vector<32x8xf32>, vector<2x8xf32> -> vector<2x8xf32>
    %c0_9 = arith.constant 0 : index
    %c0_10 = arith.constant 0 : index
    %10 = vector.load %arg4[%c0_9, %c0_10] : memref<1x8xf32, #tpu.memory_space<vmem>>, vector<1x8xf32>
    %11 = vector.broadcast %10 : vector<1x8xf32> to vector<2x8xf32>
    %12 = arith.addf %9, %11 : vector<2x8xf32>
    %c0_11 = arith.constant 0 : index
    %c0_12 = arith.constant 0 : index
    %13 = vector.load %arg5[%c0_11, %c0_12] : memref<32x8xf32, #tpu.memory_space<vmem>>, vector<32x8xf32>
    %cst_13 = arith.constant dense<0.000000e+00> : vector<2x8xf32>
    %14 = tpu.matmul %7, %13, %cst_13 {dimension_numbers = #tpu.dot_dimension_numbers<[1], [0], [0], [1], [0, 0, 1, 1], [], []>} : vector<2x32xf32>, vector<32x8xf32>, vector<2x8xf32> -> vector<2x8xf32>
    %c0_14 = arith.constant 0 : index
    %c0_15 = arith.constant 0 : index
    %15 = vector.load %arg6[%c0_14, %c0_15] : memref<1x8xf32, #tpu.memory_space<vmem>>, vector<1x8xf32>
    %16 = vector.broadcast %15 : vector<1x8xf32> to vector<2x8xf32>
    %17 = arith.addf %14, %16 : vector<2x8xf32>
    %c0_16 = arith.constant 0 : index
    %c0_17 = arith.constant 0 : index
    %18 = vector.load %arg7[%c0_16, %c0_17] : memref<8x32xf32, #tpu.memory_space<vmem>>, vector<8x32xf32>
    %cst_18 = arith.constant dense<0.000000e+00> : vector<2x32xf32>
    %19 = tpu.matmul %12, %18, %cst_18 {dimension_numbers = #tpu.dot_dimension_numbers<[1], [0], [0], [1], [0, 0, 1, 1], [], []>} : vector<2x8xf32>, vector<8x32xf32>, vector<2x32xf32> -> vector<2x32xf32>
    %c0_19 = arith.constant 0 : index
    %c0_20 = arith.constant 0 : index
    %20 = vector.load %arg8[%c0_19, %c0_20] : memref<1x32xf32, #tpu.memory_space<vmem>>, vector<1x32xf32>
    %21 = vector.broadcast %20 : vector<1x32xf32> to vector<2x32xf32>
    %22 = arith.addf %19, %21 : vector<2x32xf32>
    %cst_21 = arith.constant 0.000000e+00 : f32
    %23 = vector.broadcast %cst_21 : f32 to vector<2x32xf32>
    %24 = arith.maximumf %22, %23 : vector<2x32xf32>
    %c0_22 = arith.constant 0 : index
    %c0_23 = arith.constant 0 : index
    %25 = vector.load %arg9[%c0_22, %c0_23] : memref<32x64xf32, #tpu.memory_space<vmem>>, vector<32x64xf32>
    %cst_24 = arith.constant dense<0.000000e+00> : vector<2x64xf32>
    %26 = tpu.matmul %24, %25, %cst_24 {dimension_numbers = #tpu.dot_dimension_numbers<[1], [0], [0], [1], [0, 0, 1, 1], [], []>} : vector<2x32xf32>, vector<32x64xf32>, vector<2x64xf32> -> vector<2x64xf32>
    %c0_25 = arith.constant 0 : index
    %c0_26 = arith.constant 0 : index
    %27 = vector.load %arg10[%c0_25, %c0_26] : memref<1x64xf32, #tpu.memory_space<vmem>>, vector<1x64xf32>
    %28 = vector.broadcast %27 : vector<1x64xf32> to vector<2x64xf32>
    %29 = arith.addf %26, %28 : vector<2x64xf32>
    %cst_27 = arith.constant 0.000000e+00 : f32
    %30 = vector.broadcast %cst_27 : f32 to vector<2x64xf32>
    %31 = arith.maximumf %29, %30 : vector<2x64xf32>
    %c0_28 = arith.constant 0 : index
    %c0_29 = arith.constant 0 : index
    %32 = vector.load %arg11[%c0_28, %c0_29] : memref<64x24xf32, #tpu.memory_space<vmem>>, vector<64x24xf32>
    %cst_30 = arith.constant dense<0.000000e+00> : vector<2x24xf32>
    %33 = tpu.matmul %31, %32, %cst_30 {dimension_numbers = #tpu.dot_dimension_numbers<[1], [0], [0], [1], [0, 0, 1, 1], [], []>} : vector<2x64xf32>, vector<64x24xf32>, vector<2x24xf32> -> vector<2x24xf32>
    %c0_31 = arith.constant 0 : index
    %c0_32 = arith.constant 0 : index
    %34 = vector.load %arg12[%c0_31, %c0_32] : memref<1x24xf32, #tpu.memory_space<vmem>>, vector<1x24xf32>
    %35 = vector.broadcast %34 : vector<1x24xf32> to vector<2x24xf32>
    %36 = arith.addf %33, %35 : vector<2x24xf32>
    %c0_33 = arith.constant 0 : index
    %c0_34 = arith.constant 0 : index
    %37 = vector.load %arg19[%c0_33, %c0_34] : memref<2x24xf32, #tpu.memory_space<vmem>>, vector<2x24xf32>
    tpu.vector_store %arg19[%c0_33, %c0_34], %36 {strides = array<i32>} : memref<2x24xf32, #tpu.memory_space<vmem>>, vector<2x24xf32>,
    %c0_35 = arith.constant 0 : index
    %c0_36 = arith.constant 0 : index
    %38 = vector.load %arg13[%c0_35, %c0_36] : memref<8x32xf32, #tpu.memory_space<vmem>>, vector<8x32xf32>
    %cst_37 = arith.constant dense<0.000000e+00> : vector<2x32xf32>
    %39 = tpu.matmul %17, %38, %cst_37 {dimension_numbers = #tpu.dot_dimension_numbers<[1], [0], [0], [1], [0, 0, 1, 1], [], []>} : vector<2x8xf32>, vector<8x32xf32>, vector<2x32xf32> -> vector<2x32xf32>
    %c0_38 = arith.constant 0 : index
    %c0_39 = arith.constant 0 : index
    %40 = vector.load %arg14[%c0_38, %c0_39] : memref<1x32xf32, #tpu.memory_space<vmem>>, vector<1x32xf32>
    %41 = vector.broadcast %40 : vector<1x32xf32> to vector<2x32xf32>
    %42 = arith.addf %39, %41 : vector<2x32xf32>
    %cst_40 = arith.constant 0.000000e+00 : f32
    %43 = vector.broadcast %cst_40 : f32 to vector<2x32xf32>
    %44 = arith.maximumf %42, %43 : vector<2x32xf32>
    %c0_41 = arith.constant 0 : index
    %c0_42 = arith.constant 0 : index
    %45 = vector.load %arg15[%c0_41, %c0_42] : memref<32x64xf32, #tpu.memory_space<vmem>>, vector<32x64xf32>
    %cst_43 = arith.constant dense<0.000000e+00> : vector<2x64xf32>
    %46 = tpu.matmul %44, %45, %cst_43 {dimension_numbers = #tpu.dot_dimension_numbers<[1], [0], [0], [1], [0, 0, 1, 1], [], []>} : vector<2x32xf32>, vector<32x64xf32>, vector<2x64xf32> -> vector<2x64xf32>
    %c0_44 = arith.constant 0 : index
    %c0_45 = arith.constant 0 : index
    %47 = vector.load %arg16[%c0_44, %c0_45] : memref<1x64xf32, #tpu.memory_space<vmem>>, vector<1x64xf32>
    %48 = vector.broadcast %47 : vector<1x64xf32> to vector<2x64xf32>
    %49 = arith.addf %46, %48 : vector<2x64xf32>
    %cst_46 = arith.constant 0.000000e+00 : f32
    %50 = vector.broadcast %cst_46 : f32 to vector<2x64xf32>
    %51 = arith.maximumf %49, %50 : vector<2x64xf32>
    %c0_47 = arith.constant 0 : index
    %c0_48 = arith.constant 0 : index
    %52 = vector.load %arg17[%c0_47, %c0_48] : memref<64x24xf32, #tpu.memory_space<vmem>>, vector<64x24xf32>
    %cst_49 = arith.constant dense<0.000000e+00> : vector<2x24xf32>
    %53 = tpu.matmul %51, %52, %cst_49 {dimension_numbers = #tpu.dot_dimension_numbers<[1], [0], [0], [1], [0, 0, 1, 1], [], []>} : vector<2x64xf32>, vector<64x24xf32>, vector<2x24xf32> -> vector<2x24xf32>
    %c0_50 = arith.constant 0 : index
    %c0_51 = arith.constant 0 : index
    %54 = vector.load %arg18[%c0_50, %c0_51] : memref<1x24xf32, #tpu.memory_space<vmem>>, vector<1x24xf32>
    %55 = vector.broadcast %54 : vector<1x24xf32> to vector<2x24xf32>
    %56 = arith.addf %53, %55 : vector<2x24xf32>
    %c0_52 = arith.constant 0 : index
    %c0_53 = arith.constant 0 : index
    %57 = vector.load %arg20[%c0_52, %c0_53] : memref<2x24xf32, #tpu.memory_space<vmem>>, vector<2x24xf32>
    tpu.vector_store %arg20[%c0_52, %c0_53], %56 {strides = array<i32>} : memref<2x24xf32, #tpu.memory_space<vmem>>, vector<2x24xf32>,
    return
  }
}

</mosaic_0001>

<llo_original>
// kernel: _lambda_.2
$region0: #{_lambda_.2}
  #allocation0 [shape = 'u32[]', space=smem, size = 0x4, offset = 0x4, fixed_abs, tag = 'smem constant byte address 0x4 - core index']
  #allocation1 [shape = 'u32[144,128]{1,0:T(1,128)}', space=vmem, size = 0x12000, scoped, tag = 'internal scratch']
  #allocation2 [shape = 'f32[64,1]{1,0:T(8,128)}', space=vmem, size = 0x8000, scoped, tag = 'scratch operand']
  %s0 = inlined_call_operand.vmem [shape: f32[2,3,16], index: 0, kind: input, shape index: {}]
  %s1 = inlined_call_operand.hbm [shape: f32[16,3], index: 1, kind: input, shape index: {}]
  %s2 = inlined_call_operand.vmem [shape: f32[16,1], index: 2, kind: input, shape index: {}]
  %s3 = inlined_call_operand.hbm [shape: f32[32,16], index: 3, kind: input, shape index: {}]
  %s4 = inlined_call_operand.vmem [shape: f32[32,1], index: 4, kind: input, shape index: {}]
  %s5 = inlined_call_operand.hbm [shape: f32[64,32], index: 5, kind: input, shape index: {}]
  %s6 = inlined_call_operand.hbm [shape: f32[64,1], index: 6, kind: input, shape index: {}]
  %s7 = inlined_call_operand.vmem [shape: f32[2,64,1], index: 7, kind: output, shape index: {}]
  %s8 = sld [smem:[#allocation0]]
  $region85: #{_lambda_.2} parent=0
    _
  %s10 = ssub.s32 1, %s8
  %s11 = scalar_select 0, %s10, %s8
  $region1: #{_lambda_.2} parent=0
    #allocation3 [shape = 'u8[8192]{0}', space=vmem, size = 0x2000, scoped, tag = 'input window, operand 1, single buffered']
    #allocation4 [shape = 's32[2]{0}', space=sflag, size = 0x8, scoped, tag = 'scoped memory for _lambda_.2']
    #allocation5 [shape = 'u8[16384]{0}', space=vmem, size = 0x4000, scoped, tag = 'input window, operand 3, single buffered']
    #allocation6 [shape = 's32[1]{0}', space=sflag, size = 0x4, scoped, tag = 'scoped memory for _lambda_.2']
    #allocation7 [shape = 'u8[32768]{0}', space=vmem, size = 0x8000, scoped, tag = 'input window, operand 5, single buffered']
    #allocation8 [shape = 'u8[32768]{0}', space=vmem, size = 0x8000, scoped, tag = 'input window, operand 6, single buffered']
    #allocation9 [shape = 's32[1]{0}', space=sflag, size = 0x4, scoped, tag = 'scoped memory for _lambda_.2']
    %12 = vsyncpa [#allocation4], 0
    %13 = vsyncpa [#allocation6], 0
    %14 = vsyncpa [#allocation9], 0
    loop: start=0, step=1, limit=4
    $region2: #{_lambda_.2} parent=1 // loop_pre_header
      _
    $region3: #{_lambda_.2} parent=1 // loop_header
      %s16 = sphi 0, %s20
      %p17 = scmp.ge.s32.totalorder %s16, 4
      %s23 = sphi 0, %s35
      %s24 = sphi 0, %s31
      %s25 = sphi 0, %s23
      %s26 = sphi 0, %s24
      %s27 = sphi 0, %s25
      %s28 = sphi 0, %s26
      %s40 = sphi 0, %s42
      %s43 = sphi 0, %s40
      %s44 = sphi 0, %s43
      %s60 = sphi 0, %s44
      %s64 = sphi 0, %s64
      %s66 = sphi 0, %s64
      %s67 = sphi 0, %s66
      %s81 = sphi 0, %s67
      %s85 = sphi 0, %s85
      %s87 = sphi 0, %s85
      %s88 = sphi 0, %s87
      %s102 = sphi 0, %s88
      %s106 = sphi 0, %s106
      %s108 = sphi 0, %s106
      %s109 = sphi 0, %s108
      %s123 = sphi 0, %s109
      %s127 = sphi 0, %s127
      %s129 = sphi 0, %s127
      %s130 = sphi 0, %s129
      %s144 = sphi 0, %s130
      %s148 = sphi 0, %s148
      %s150 = sphi 0, %s148
      %s151 = sphi 0, %s150
      %s165 = sphi 0, %s151
      %s169 = sphi 0, %s169
      %s171 = sphi 0, %s169
      %s172 = sphi 0, %s171
      %s186 = sphi 0, %s172
      %s192 = sphi 0, %s194
      %s195 = sphi 0, %s192
      %s196 = sphi 0, %s195
      %s212 = sphi 0, %s196
    $region4: #{_lambda_.2} parent=1 // loop_header_branch
      %19 = sbr.rel (%p17) target = $region8
    $region5: #{_lambda_.2} parent=1 // loop_body
      %s21 = ssub.s32 %s16, 1
      %s22 = ssub.s32 %s16, 2
      %s29 = sadd.s32 1, %s24
      %p30 = scmp.ge.s32.totalorder %s29, 1
      %s31 = scalar_select %p30, 0, %s29
      %s32 = sadd.s32 1, %s23
      %s33 = scalar_select %p30, %s32, %s23
      %p34 = scmp.ge.s32.totalorder %s33, 2
      %s35 = scalar_select %p34, 0, %s33
      %s36 = ssub.s32 %s23, %s35
      %s37 = ssub.s32 %s24, %s31
      %s38 = sor.u32 %s36, %s37
      %p39 = scmp.eq.s32.totalorder %s38, 0
      %s41 = sadd.s32 %s40, 1
      %s42 = scalar_select %p39, %s40, %s41
      %p45 = pneg %p39
      %p46 = scmp.eq.s32.totalorder %s16, 1
      %p47 = por %p45, %p46
      %p48 = scmp.ne.s32.totalorder %s40, %s43
      %p49 = scmp.eq.s32.totalorder %s16, 0
      %p50 = por %p48, %p49
      %p51 = scmp.ne.s32.totalorder %s40, %s43
      %p52 = scmp.eq.s32.totalorder %s21, 1
      %p53 = por %p51, %p52
      %p54 = scmp.ne.s32.totalorder %s43, %s44
      %p55 = scmp.eq.s32.totalorder %s21, 0
      %p56 = por %p54, %p55
      %p57 = scmp.ne.s32.totalorder %s43, %s44
      %p58 = scmp.eq.s32.totalorder %s22, 1
      %p59 = por %p57, %p58
      %p61 = scmp.ne.s32.totalorder %s44, %s60
      %p62 = scmp.eq.s32.totalorder %s22, 0
      %p63 = por %p61, %p62
      %s65 = sadd.s32 %s64, 1
      %p68 = scmp.eq.s32.totalorder %s16, 1
      %p69 = scmp.ne.s32.totalorder %s64, %s66
      %p70 = scmp.eq.s32.totalorder %s16, 0
      %p71 = por %p69, %p70
      %p72 = scmp.ne.s32.totalorder %s64, %s66
      %p73 = scmp.eq.s32.totalorder %s21, 1
      %p74 = por %p72, %p73
      %p75 = scmp.ne.s32.totalorder %s66, %s67
      %p76 = scmp.eq.s32.totalorder %s21, 0
      %p77 = por %p75, %p76
      %p78 = scmp.ne.s32.totalorder %s66, %s67
      %p79 = scmp.eq.s32.totalorder %s22, 1
      %p80 = por %p78, %p79
      %p82 = scmp.ne.s32.totalorder %s67, %s81
      %p83 = scmp.eq.s32.totalorder %s22, 0
      %p84 = por %p82, %p83
      %s86 = sadd.s32 %s85, 1
      %p89 = scmp.eq.s32.totalorder %s16, 1
      %p90 = scmp.ne.s32.totalorder %s85, %s87
      %p91 = scmp.eq.s32.totalorder %s16, 0
      %p92 = por %p90, %p91
      %p93 = scmp.ne.s32.totalorder %s85, %s87
      %p94 = scmp.eq.s32.totalorder %s21, 1
      %p95 = por %p93, %p94
      %p96 = scmp.ne.s32.totalorder %s87, %s88
      %p97 = scmp.eq.s32.totalorder %s21, 0
      %p98 = por %p96, %p97
      %p99 = scmp.ne.s32.totalorder %s87, %s88
      %p100 = scmp.eq.s32.totalorder %s22, 1
      %p101 = por %p99, %p100
      %p103 = scmp.ne.s32.totalorder %s88, %s102
      %p104 = scmp.eq.s32.totalorder %s22, 0
      %p105 = por %p103, %p104
      %s107 = sadd.s32 %s106, 1
      %p110 = scmp.eq.s32.totalorder %s16, 1
      %p111 = scmp.ne.s32.totalorder %s106, %s108
      %p112 = scmp.eq.s32.totalorder %s16, 0
      %p113 = por %p111, %p112
      %p114 = scmp.ne.s32.totalorder %s106, %s108
      %p115 = scmp.eq.s32.totalorder %s21, 1
      %p116 = por %p114, %p115
      %p117 = scmp.ne.s32.totalorder %s108, %s109
      %p118 = scmp.eq.s32.totalorder %s21, 0
      %p119 = por %p117, %p118
      %p120 = scmp.ne.s32.totalorder %s108, %s109
      %p121 = scmp.eq.s32.totalorder %s22, 1
      %p122 = por %p120, %p121
      %p124 = scmp.ne.s32.totalorder %s109, %s123
      %p125 = scmp.eq.s32.totalorder %s22, 0
      %p126 = por %p124, %p125
      %s128 = sadd.s32 %s127, 1
      %p131 = scmp.eq.s32.totalorder %s16, 1
      %p132 = scmp.ne.s32.totalorder %s127, %s129
      %p133 = scmp.eq.s32.totalorder %s16, 0
      %p134 = por %p132, %p133
      %p135 = scmp.ne.s32.totalorder %s127, %s129
      %p136 = scmp.eq.s32.totalorder %s21, 1
      %p137 = por %p135, %p136
      %p138 = scmp.ne.s32.totalorder %s129, %s130
      %p139 = scmp.eq.s32.totalorder %s21, 0
      %p140 = por %p138, %p139
      %p141 = scmp.ne.s32.totalorder %s129, %s130
      %p142 = scmp.eq.s32.totalorder %s22, 1
      %p143 = por %p141, %p142
      %p145 = scmp.ne.s32.totalorder %s130, %s144
      %p146 = scmp.eq.s32.totalorder %s22, 0
      %p147 = por %p145, %p146
      %s149 = sadd.s32 %s148, 1
      %p152 = scmp.eq.s32.totalorder %s16, 1
      %p153 = scmp.ne.s32.totalorder %s148, %s150
      %p154 = scmp.eq.s32.totalorder %s16, 0
      %p155 = por %p153, %p154
      %p156 = scmp.ne.s32.totalorder %s148, %s150
      %p157 = scmp.eq.s32.totalorder %s21, 1
      %p158 = por %p156, %p157
      %p159 = scmp.ne.s32.totalorder %s150, %s151
      %p160 = scmp.eq.s32.totalorder %s21, 0
      %p161 = por %p159, %p160
      %p162 = scmp.ne.s32.totalorder %s150, %s151
      %p163 = scmp.eq.s32.totalorder %s22, 1
      %p164 = por %p162, %p163
      %p166 = scmp.ne.s32.totalorder %s151, %s165
      %p167 = scmp.eq.s32.totalorder %s22, 0
      %p168 = por %p166, %p167
      %s170 = sadd.s32 %s169, 1
      %p173 = scmp.eq.s32.totalorder %s16, 1
      %p174 = scmp.ne.s32.totalorder %s169, %s171
      %p175 = scmp.eq.s32.totalorder %s16, 0
      %p176 = por %p174, %p175
      %p177 = scmp.ne.s32.totalorder %s169, %s171
      %p178 = scmp.eq.s32.totalorder %s21, 1
      %p179 = por %p177, %p178
      %p180 = scmp.ne.s32.totalorder %s171, %s172
      %p181 = scmp.eq.s32.totalorder %s21, 0
      %p182 = por %p180, %p181
      %p183 = scmp.ne.s32.totalorder %s171, %s172
      %p184 = scmp.eq.s32.totalorder %s22, 1
      %p185 = por %p183, %p184
      %p187 = scmp.ne.s32.totalorder %s172, %s186
      %p188 = scmp.eq.s32.totalorder %s22, 0
      %p189 = por %p187, %p188
      %s190 = ssub.s32 %s23, %s35
      %p191 = scmp.eq.s32.totalorder %s190, 0
      %s193 = sadd.s32 %s192, 1
      %s194 = scalar_select %p191, %s192, %s193
      %p197 = pneg %p191
      %p198 = scmp.eq.s32.totalorder %s16, 1
      %p199 = por %p197, %p198
      %p200 = scmp.ne.s32.totalorder %s192, %s195
      %p201 = scmp.eq.s32.totalorder %s16, 0
      %p202 = por %p200, %p201
      %p203 = scmp.ne.s32.totalorder %s192, %s195
      %p204 = scmp.eq.s32.totalorder %s21, 1
      %p205 = por %p203, %p204
      %p206 = scmp.ne.s32.totalorder %s195, %s196
      %p207 = scmp.eq.s32.totalorder %s21, 0
      %p208 = por %p206, %p207
      %p209 = scmp.ne.s32.totalorder %s195, %s196
      %p210 = scmp.eq.s32.totalorder %s22, 1
      %p211 = por %p209, %p210
      %p213 = scmp.ne.s32.totalorder %s196, %s212
      %p214 = scmp.eq.s32.totalorder %s22, 0
      %p215 = por %p213, %p214
      %p216 = scmp.le.s32.totalorder 1, %s16
      %p217 = scmp.lt.s32.totalorder %s16, 3
      %p218 = pnand %p216, %p217
      %p219 = pneg %p218
      // Predicated region
      $region9: #{_lambda_.2} parent=5 // pred_check
        _
      $region10: #{_lambda_.2} parent=5 // pred_check_branch
        %221 = sbr.rel (%p218) target = $region12
      $region11: #{_lambda_.2} parent=5 // pred_region
        %s222 = ssub.s32 %s16, 1
        // Predicated region
        $region13: #{_lambda_.2} parent=11 // pred_check
          %p223 = pneg %p77
        $region14: #{_lambda_.2} parent=11 // pred_check_branch
          %225 = sbr.rel (%p223) target = $region16
        $region15: #{_lambda_.2} parent=11 // pred_region
          %s227 = ssub.s32 256, 256
          %228 = vsyncadd [#allocation4], %s227
          %s229 = sshll.u32 [#allocation3], 4
          %s230 = int_to_ptr.vmem [resolvable:$true] %s229
          %235 = dma.hbm_to_vmem [thread:$0]  %s1, 256, %s230, [#allocation4], 128, 128, 8
        $region16: #{_lambda_.2} parent=11 // pred_fallthru
          _
        // Predicated region
        $region17: #{_lambda_.2} parent=11 // pred_check
          %p236 = pneg %p98
        $region18: #{_lambda_.2} parent=11 // pred_check_branch
          %238 = sbr.rel (%p236) target = $region20
        $region19: #{_lambda_.2} parent=11 // pred_region
          _
        $region20: #{_lambda_.2} parent=11 // pred_fallthru
          _
        // Predicated region
        $region21: #{_lambda_.2} parent=11 // pred_check
          %p239 = pneg %p119
        $region22: #{_lambda_.2} parent=11 // pred_check_branch
          %241 = sbr.rel (%p239) target = $region24
        $region23: #{_lambda_.2} parent=11 // pred_region
          %s243 = ssub.s32 512, 512
          %244 = vsyncadd [#allocation6], %s243
          %s245 = sshll.u32 [#allocation5], 4
          %s246 = int_to_ptr.vmem [resolvable:$true] %s245
          %251 = dma.hbm_to_vmem [thread:$0]  %s3, 512, %s246, [#allocation6], 128, 128, 8
        $region24: #{_lambda_.2} parent=11 // pred_fallthru
          _
        // Predicated region
        $region25: #{_lambda_.2} parent=11 // pred_check
          %p252 = pneg %p140
        $region26: #{_lambda_.2} parent=11 // pred_check_branch
          %254 = sbr.rel (%p252) target = $region28
        $region27: #{_lambda_.2} parent=11 // pred_region
          _
        $region28: #{_lambda_.2} parent=11 // pred_fallthru
          _
        // Predicated region
        $region29: #{_lambda_.2} parent=11 // pred_check
          %p255 = pneg %p161
        $region30: #{_lambda_.2} parent=11 // pred_check_branch
          %257 = sbr.rel (%p255) target = $region32
        $region31: #{_lambda_.2} parent=11 // pred_region
          %s259 = ssub.s32 1024, 1024
          %260 = vsyncadd [#allocation6], %s259
          %s261 = sshll.u32 [#allocation7], 4
          %s262 = int_to_ptr.vmem [resolvable:$true] %s261
          %267 = dma.hbm_to_vmem [thread:$0]  %s5, 1024, %s262, [#allocation6], 128, 128, 8
        $region32: #{_lambda_.2} parent=11 // pred_fallthru
          _
        // Predicated region
        $region33: #{_lambda_.2} parent=11 // pred_check
          %p268 = pneg %p182
        $region34: #{_lambda_.2} parent=11 // pred_check_branch
          %270 = sbr.rel (%p268) target = $region36
        $region35: #{_lambda_.2} parent=11 // pred_region
          %s272 = ssub.s32 1024, 1024
          %273 = vsyncadd [#allocation9], %s272
          %s274 = sshll.u32 [#allocation8], 4
          %s275 = int_to_ptr.vmem [resolvable:$true] %s274
          %280 = dma.hbm_to_vmem [thread:$0]  %s6, 1024, %s275, [#allocation9], 128, 128, 8
        $region36: #{_lambda_.2} parent=11 // pred_fallthru
          _
      $region12: #{_lambda_.2} parent=5 // pred_fallthru
        _
      %p281 = scmp.lt.s32.totalorder %s16, 2
      // Predicated region
      $region37: #{_lambda_.2} parent=5 // pred_check
        %p282 = pneg %p281
      $region38: #{_lambda_.2} parent=5 // pred_check_branch
        %284 = sbr.rel (%p282) target = $region40
      $region39: #{_lambda_.2} parent=5 // pred_region
        // Predicated region
        $region41: #{_lambda_.2} parent=39 // pred_check
          %p285 = pneg %p50
        $region42: #{_lambda_.2} parent=39 // pred_check_branch
          %287 = sbr.rel (%p285) target = $region44
        $region43: #{_lambda_.2} parent=39 // pred_region
          %p288 = scmp.lt.s32.totalorder %s23, 1
          %s289 = scalar_select %p288, %s23, 1
          %p290 = scmp.lt.s32.totalorder %s24, 0
          %s291 = scalar_select %p290, %s24, 0
          %s292 = sadd.s32 %s291, %s289
          %s293 = smul.addr %s292, 4
          %s294 = scalar_lea.vmem %s0, %s293
        $region44: #{_lambda_.2} parent=39 // pred_fallthru
          _
      $region40: #{_lambda_.2} parent=5 // pred_fallthru
        _
      %p295 = scmp.le.s32.totalorder 1, %s16
      %p296 = scmp.lt.s32.totalorder %s16, 3
      %p297 = pnand %p295, %p296
      %p298 = pneg %p297
      // Predicated region
      $region45: #{_lambda_.2} parent=5 // pred_check
        _
      $region46: #{_lambda_.2} parent=5 // pred_check_branch
        %300 = sbr.rel (%p297) target = $region48
      $region47: #{_lambda_.2} parent=5 // pred_region
        %s301 = ssub.s32 %s16, 1
        // Predicated region
        $region49: #{_lambda_.2} parent=47 // pred_check
          %p302 = pneg %p77
        $region50: #{_lambda_.2} parent=47 // pred_check_branch
          %304 = sbr.rel (%p302) target = $region52
        $region51: #{_lambda_.2} parent=47 // pred_region
          %305 = dma.done [#allocation4], 256
        $region52: #{_lambda_.2} parent=47 // pred_fallthru
          _
        // Predicated region
        $region53: #{_lambda_.2} parent=47 // pred_check
          %p306 = pneg %p119
        $region54: #{_lambda_.2} parent=47 // pred_check_branch
          %308 = sbr.rel (%p306) target = $region56
        $region55: #{_lambda_.2} parent=47 // pred_region
          %309 = dma.done [#allocation6], 512
        $region56: #{_lambda_.2} parent=47 // pred_fallthru
          _
        // Predicated region
        $region57: #{_lambda_.2} parent=47 // pred_check
          %p310 = pneg %p161
        $region58: #{_lambda_.2} parent=47 // pred_check_branch
          %312 = sbr.rel (%p310) target = $region60
        $region59: #{_lambda_.2} parent=47 // pred_region
          %313 = dma.done [#allocation6], 1024
        $region60: #{_lambda_.2} parent=47 // pred_fallthru
          _
        // Predicated region
        $region61: #{_lambda_.2} parent=47 // pred_check
          %p314 = pneg %p182
        $region62: #{_lambda_.2} parent=47 // pred_check_branch
          %316 = sbr.rel (%p314) target = $region64
        $region63: #{_lambda_.2} parent=47 // pred_region
          %317 = dma.done [#allocation9], 1024
        $region64: #{_lambda_.2} parent=47 // pred_fallthru
          _
        %p318 = scmp.lt.s32.totalorder %s25, 1
        %s319 = scalar_select %p318, %s25, 1
        %p320 = scmp.lt.s32.totalorder %s26, 0
        %s321 = scalar_select %p320, %s26, 0
        %s322 = sadd.s32 %s321, %s319
        %s323 = smul.addr %s322, 4
        %s324 = scalar_lea.vmem %s0, %s323
        %p325 = pneg %p56
        %p326 = pneg %p53
        %p327 = pneg %p77
        %p328 = pneg %p74
        %p329 = pneg %p98
        %p330 = pneg %p95
        %p331 = pneg %p119
        %p332 = pneg %p116
        %p333 = pneg %p140
        %p334 = pneg %p137
        %p335 = pneg %p161
        %p336 = pneg %p158
        %p337 = pneg %p182
        %p338 = pneg %p179
        %p339 = pneg %p208
        %p340 = pneg %p205
        %p341 = scmp.lt.s32.totalorder %s25, 1
        %s342 = scalar_select %p341, %s25, 1
        %s343 = smul.addr %s342, 8
        %s344 = smul.addr %s343, 8
        %s345 = scalar_lea.vmem %s7, %s344
        %p346 = scmp.lt.s32.totalorder %s25, 1
        %s347 = scalar_select %p346, %s25, 1
        %p348 = scmp.lt.s32.totalorder %s26, 0
        %s349 = scalar_select %p348, %s26, 0
        %s350 = sadd.s32 %s349, %s347
        %s351 = smul.addr %s350, 4
        %s352 = scalar_lea.vmem %s0, %s351
        %p353 = scmp.lt.s32.totalorder %s25, 1
        %s354 = scalar_select %p353, %s25, 1
        %s355 = smul.addr %s354, 8
        %s356 = smul.addr %s355, 8
        %s357 = scalar_lea.vmem %s7, %s356
        %p358 = scmp.eq.s32.totalorder %s26, 0
        // Predicated region
        $region65: #{_lambda_.2} parent=47 // pred_check
          %p359 = pneg %p358
        $region66: #{_lambda_.2} parent=47 // pred_check_branch
          %361 = sbr.rel (%p359) target = $region68
        $region67: #{_lambda_.2} parent=47 // pred_region
          %vm362 = vcmask 7168
          %363 = vst.msk [vmem:[#allocation2] sm:$0xff] %vm362, -inf
          %364 = vst.msk [vmem:[#allocation2 + $0x8] sm:$0xff] %vm362, -inf
          %365 = vst.msk [vmem:[#allocation2 + $0x10] sm:$0xff] %vm362, -inf
          %366 = vst.msk [vmem:[#allocation2 + $0x18] sm:$0xff] %vm362, -inf
          %367 = vst.msk [vmem:[#allocation2 + $0x20] sm:$0xff] %vm362, -inf
          %368 = vst.msk [vmem:[#allocation2 + $0x28] sm:$0xff] %vm362, -inf
          %369 = vst.msk [vmem:[#allocation2 + $0x30] sm:$0xff] %vm362, -inf
          %370 = vst.msk [vmem:[#allocation2 + $0x38] sm:$0xff] %vm362, -inf
        $region68: #{_lambda_.2} parent=47 // pred_fallthru
          _
        %v371 = vld [vmem:[%s352] sm:$0x7]
        %v372 = vld [vmem:[#allocation3] sm:$0xff]
        %v373 = vld [vmem:[#allocation3 + $0x8] sm:$0xff]
        %v374 = vld [vmem:[%s2] sm:$0xff]
        %v375 = vld [vmem:[%s2 + $0x8] sm:$0xff]
        %377 = vset.pattern.permute.xlu0 0
        %378 = vperm.xlu0 %377, %v374
        %v379 = vpop.permute.xlu0 %378
        %382 = vset.pattern.permute.xlu0 0
        %383 = vperm.xlu0 %382, %v375
        %v384 = vpop.permute.xlu0 %383
        %vm386 = vcmask 23552
        %v388 = vsel %vm386, %v372, 0
        %v391 = vsel %vm386, %v373, 0
        %vm393 = vcmask 1042432
        %v395 = vsel %vm393, %v371, 0
        %397 = vmatprep.subr.mxu0 0.0
        %398 = vmatpush1.msra.mxu0 0.0
        %399 = vmatprep.subr.mxu0 0.0
        %400 = vmatpush1.msra.mxu0 0.0
        %401 = vmatprep.subr.mxu0 0.0
        %402 = vmatpush1.msra.mxu0 0.0
        %403 = vmatprep.subr.mxu0 0.0
        %404 = vmatpush1.msra.mxu0 0.0
        %405 = vmatprep.subr.mxu0 0.0
        %406 = vmatpush1.msra.mxu0 0.0
        %407 = vmatprep.subr.mxu0 0.0
        %408 = vmatpush1.msra.mxu0 0.0
        %409 = vmatprep.subr.mxu0 0.0
        %410 = vmatpush1.msra.mxu0 0.0
        %411 = vmatprep.subr.mxu0 0.0
        %412 = vmatpush1.msra.mxu0 0.0
        %413 = vmatprep.subr.mxu0 0.0
        %414 = vmatpush1.msra.mxu0 0.0
        %415 = vmatprep.subr.mxu0 0.0
        %416 = vmatpush1.msra.mxu0 0.0
        %417 = vmatprep.subr.mxu0 0.0
        %418 = vmatpush1.msra.mxu0 0.0
        %419 = vmatprep.subr.mxu0 0.0
        %420 = vmatpush1.msra.mxu0 0.0
        %421 = vmatprep.subr.mxu0 0.0
        %422 = vmatpush1.msra.mxu0 0.0
        %423 = vmatprep.subr.mxu0 0.0
        %424 = vmatpush1.msra.mxu0 0.0
        %425 = vmatprep.subr.mxu0 0.0
        %426 = vmatpush1.msra.mxu0 0.0
        %427 = vmatprep.subr.mxu0 0.0
        %428 = vmatpush1.msra.mxu0 %v395
        %429 = vmatprep.subr.mxu0 0.0
        %430 = vmatpush2.msra.mxu0 0.0
        %431 = vmatprep.subr.mxu0 0.0
        %432 = vmatpush2.msra.mxu0 0.0
        %433 = vmatprep.subr.mxu0 0.0
        %434 = vmatpush2.msra.mxu0 0.0
        %435 = vmatprep.subr.mxu0 0.0
        %436 = vmatpush2.msra.mxu0 0.0
        %437 = vmatprep.subr.mxu0 0.0
        %438 = vmatpush2.msra.mxu0 0.0
        %439 = vmatprep.subr.mxu0 0.0
        %440 = vmatpush2.msra.mxu0 0.0
        %441 = vmatprep.subr.mxu0 0.0
        %442 = vmatpush2.msra.mxu0 0.0
        %443 = vmatprep.subr.mxu0 0.0
        %444 = vmatpush2.msra.mxu0 0.0
        %445 = vmatprep.subr.mxu0 0.0
        %446 = vmatpush2.msra.mxu0 0.0
        %447 = vmatprep.subr.mxu0 0.0
        %448 = vmatpush2.msra.mxu0 0.0
        %449 = vmatprep.subr.mxu0 0.0
        %450 = vmatpush2.msra.mxu0 0.0
        %451 = vmatprep.subr.mxu0 0.0
        %452 = vmatpush2.msra.mxu0 0.0
        %453 = vmatprep.subr.mxu0 0.0
        %454 = vmatpush2.msra.mxu0 0.0
        %455 = vmatprep.subr.mxu0 0.0
        %456 = vmatpush2.msra.mxu0 0.0
        %457 = vmatprep.subr.mxu0 0.0
        %458 = vmatpush2.msra.mxu0 0.0
        %459 = vmatprep.subr.mxu0 0.0
        %460 = vmatpush2.msra.mxu0 0.0
        %461 = vmatprep.mubr.f32.mxu0 0.0
        %462 = vmatmul.mubr.f32.gmra.mxu0 %v388
        %v463 = vpop.f32.mrf.mxu0
        %v464 = vadd.f32 %v379, %v463
        %v465 = vpop.f32.mrf.mxu0
        %466 = vmatprep.mubr.f32.mxu0 0.0
        %467 = vmatmul.mubr.f32.gmra.mxu0 %v391
        %v468 = vpop.f32.mrf.mxu0
        %v469 = vadd.f32 %v384, %v468
        %v470 = vpop.f32.mrf.mxu0
        %471 = vdwg.mxu0
        %v472 = vmax.f32 %v464, 0.0
        %v473 = vmax.f32 %v469, 0.0
        %v474 = vld [vmem:[#allocation5] sm:$0xff]
        %v475 = vld [vmem:[#allocation5 + $0x8] sm:$0xff]
        %v476 = vld [vmem:[#allocation5 + $0x10] sm:$0xff]
        %v477 = vld [vmem:[#allocation5 + $0x18] sm:$0xff]
        %v478 = vld [vmem:[%s4] sm:$0xff]
        %v479 = vld [vmem:[%s4 + $0x8] sm:$0xff]
        %v480 = vld [vmem:[%s4 + $0x10] sm:$0xff]
        %v481 = vld [vmem:[%s4 + $0x18] sm:$0xff]
        %483 = vset.pattern.permute.xlu0 0
        %484 = vperm.xlu0 %483, %v478
        %v485 = vpop.permute.xlu0 %484
        %488 = vset.pattern.permute.xlu0 0
        %489 = vperm.xlu0 %488, %v479
        %v490 = vpop.permute.xlu0 %489
        %493 = vset.pattern.permute.xlu0 0
        %494 = vperm.xlu0 %493, %v480
        %v495 = vpop.permute.xlu0 %494
        %498 = vset.pattern.permute.xlu0 0
        %499 = vperm.xlu0 %498, %v481
        %v500 = vpop.permute.xlu0 %499
        %vm502 = vcmask 130048
        %v504 = vsel %vm502, %v474, 0
        %v507 = vsel %vm502, %v475, 0
        %v510 = vsel %vm502, %v476, 0
        %v513 = vsel %vm502, %v477, 0
        %515 = vmatprep.subr.mxu0 0.0
        %516 = vmatpush1.msra.mxu0 0.0
        %517 = vmatprep.subr.mxu0 0.0
        %518 = vmatpush1.msra.mxu0 0.0
        %519 = vmatprep.subr.mxu0 0.0
        %520 = vmatpush1.msra.mxu0 0.0
        %521 = vmatprep.subr.mxu0 0.0
        %522 = vmatpush1.msra.mxu0 0.0
        %523 = vmatprep.subr.mxu0 0.0
        %524 = vmatpush1.msra.mxu0 0.0
        %525 = vmatprep.subr.mxu0 0.0
        %526 = vmatpush1.msra.mxu0 0.0
        %527 = vmatprep.subr.mxu0 0.0
        %528 = vmatpush1.msra.mxu0 0.0
        %529 = vmatprep.subr.mxu0 0.0
        %530 = vmatpush1.msra.mxu0 0.0
        %531 = vmatprep.subr.mxu0 0.0
        %532 = vmatpush1.msra.mxu0 0.0
        %533 = vmatprep.subr.mxu0 0.0
        %534 = vmatpush1.msra.mxu0 0.0
        %535 = vmatprep.subr.mxu0 0.0
        %536 = vmatpush1.msra.mxu0 0.0
        %537 = vmatprep.subr.mxu0 0.0
        %538 = vmatpush1.msra.mxu0 0.0
        %539 = vmatprep.subr.mxu0 0.0
        %540 = vmatpush1.msra.mxu0 0.0
        %541 = vmatprep.subr.mxu0 0.0
        %542 = vmatpush1.msra.mxu0 0.0
        %543 = vmatprep.subr.mxu0 0.0
        %544 = vmatpush1.msra.mxu0 %v473
        %545 = vmatprep.subr.mxu0 0.0
        %546 = vmatpush1.msra.mxu0 %v472
        %547 = vmatprep.subr.mxu0 0.0
        %548 = vmatpush2.msra.mxu0 0.0
        %549 = vmatprep.subr.mxu0 0.0
        %550 = vmatpush2.msra.mxu0 0.0
        %551 = vmatprep.subr.mxu0 0.0
        %552 = vmatpush2.msra.mxu0 0.0
        %553 = vmatprep.subr.mxu0 0.0
        %554 = vmatpush2.msra.mxu0 0.0
        %555 = vmatprep.subr.mxu0 0.0
        %556 = vmatpush2.msra.mxu0 0.0
        %557 = vmatprep.subr.mxu0 0.0
        %558 = vmatpush2.msra.mxu0 0.0
        %559 = vmatprep.subr.mxu0 0.0
        %560 = vmatpush2.msra.mxu0 0.0
        %561 = vmatprep.subr.mxu0 0.0
        %562 = vmatpush2.msra.mxu0 0.0
        %563 = vmatprep.subr.mxu0 0.0
        %564 = vmatpush2.msra.mxu0 0.0
        %565 = vmatprep.subr.mxu0 0.0
        %566 = vmatpush2.msra.mxu0 0.0
        %567 = vmatprep.subr.mxu0 0.0
        %568 = vmatpush2.msra.mxu0 0.0
        %569 = vmatprep.subr.mxu0 0.0
        %570 = vmatpush2.msra.mxu0 0.0
        %571 = vmatprep.subr.mxu0 0.0
        %572 = vmatpush2.msra.mxu0 0.0
        %573 = vmatprep.subr.mxu0 0.0
        %574 = vmatpush2.msra.mxu0 0.0
        %575 = vmatprep.subr.mxu0 0.0
        %576 = vmatpush2.msra.mxu0 0.0
        %577 = vmatprep.subr.mxu0 0.0
        %578 = vmatpush2.msra.mxu0 0.0
        %579 = vmatprep.mubr.f32.mxu0 0.0
        %580 = vmatmul.mubr.f32.gmra.mxu0 %v504
        %v581 = vpop.f32.mrf.mxu0
        %v582 = vadd.f32 %v485, %v581
        %v583 = vpop.f32.mrf.mxu0
        %584 = vmatprep.mubr.f32.mxu0 0.0
        %585 = vmatmul.mubr.f32.gmra.mxu0 %v507
        %v586 = vpop.f32.mrf.mxu0
        %v587 = vadd.f32 %v490, %v586
        %v588 = vpop.f32.mrf.mxu0
        %589 = vmatprep.mubr.f32.mxu0 0.0
        %590 = vmatmul.mubr.f32.gmra.mxu0 %v510
        %v591 = vpop.f32.mrf.mxu0
        %v592 = vadd.f32 %v495, %v591
        %v593 = vpop.f32.mrf.mxu0
        %594 = vmatprep.mubr.f32.mxu0 0.0
        %595 = vmatmul.mubr.f32.gmra.mxu0 %v513
        %v596 = vpop.f32.mrf.mxu0
        %v597 = vadd.f32 %v500, %v596
        %v598 = vpop.f32.mrf.mxu0
        %599 = vdwg.mxu0
        %v600 = vmax.f32 %v582, 0.0
        %v601 = vmax.f32 %v587, 0.0
        %v602 = vmax.f32 %v592, 0.0
        %v603 = vmax.f32 %v597, 0.0
        %v604 = vld [vmem:[#allocation7] sm:$0xff]
        %v605 = vld [vmem:[#allocation7 + $0x8] sm:$0xff]
        %v606 = vld [vmem:[#allocation7 + $0x10] sm:$0xff]
        %v607 = vld [vmem:[#allocation7 + $0x18] sm:$0xff]
        %v608 = vld [vmem:[#allocation7 + $0x20] sm:$0xff]
        %v609 = vld [vmem:[#allocation7 + $0x28] sm:$0xff]
        %v610 = vld [vmem:[#allocation7 + $0x30] sm:$0xff]
        %v611 = vld [vmem:[#allocation7 + $0x38] sm:$0xff]
        %v612 = vld [vmem:[#allocation8] sm:$0xff]
        %v613 = vld [vmem:[#allocation8 + $0x8] sm:$0xff]
        %v614 = vld [vmem:[#allocation8 + $0x10] sm:$0xff]
        %v615 = vld [vmem:[#allocation8 + $0x18] sm:$0xff]
        %v616 = vld [vmem:[#allocation8 + $0x20] sm:$0xff]
        %v617 = vld [vmem:[#allocation8 + $0x28] sm:$0xff]
        %v618 = vld [vmem:[#allocation8 + $0x30] sm:$0xff]
        %v619 = vld [vmem:[#allocation8 + $0x38] sm:$0xff]
        %621 = vset.pattern.permute.xlu0 0
        %622 = vperm.xlu0 %621, %v612
        %v623 = vpop.permute.xlu0 %622
        %626 = vset.pattern.permute.xlu0 0
        %627 = vperm.xlu0 %626, %v613
        %v628 = vpop.permute.xlu0 %627
        %631 = vset.pattern.permute.xlu0 0
        %632 = vperm.xlu0 %631, %v614
        %v633 = vpop.permute.xlu0 %632
        %636 = vset.pattern.permute.xlu0 0
        %637 = vperm.xlu0 %636, %v615
        %v638 = vpop.permute.xlu0 %637
        %641 = vset.pattern.permute.xlu0 0
        %642 = vperm.xlu0 %641, %v616
        %v643 = vpop.permute.xlu0 %642
        %646 = vset.pattern.permute.xlu0 0
        %647 = vperm.xlu0 %646, %v617
        %v648 = vpop.permute.xlu0 %647
        %651 = vset.pattern.permute.xlu0 0
        %652 = vperm.xlu0 %651, %v618
        %v653 = vpop.permute.xlu0 %652
        %656 = vset.pattern.permute.xlu0 0
        %657 = vperm.xlu0 %656, %v619
        %v658 = vpop.permute.xlu0 %657
        %vm660 = vcmask 261120
        %v662 = vsel %vm660, %v604, 0
        %v665 = vsel %vm660, %v605, 0
        %v668 = vsel %vm660, %v606, 0
        %v671 = vsel %vm660, %v607, 0
        %v674 = vsel %vm660, %v608, 0
        %v677 = vsel %vm660, %v609, 0
        %v680 = vsel %vm660, %v610, 0
        %v683 = vsel %vm660, %v611, 0
        %685 = vmatprep.subr.mxu0 0.0
        %686 = vmatpush1.msra.mxu0 0.0
        %687 = vmatprep.subr.mxu0 0.0
        %688 = vmatpush1.msra.mxu0 0.0
        %689 = vmatprep.subr.mxu0 0.0
        %690 = vmatpush1.msra.mxu0 0.0
        %691 = vmatprep.subr.mxu0 0.0
        %692 = vmatpush1.msra.mxu0 0.0
        %693 = vmatprep.subr.mxu0 0.0
        %694 = vmatpush1.msra.mxu0 0.0
        %695 = vmatprep.subr.mxu0 0.0
        %696 = vmatpush1.msra.mxu0 0.0
        %697 = vmatprep.subr.mxu0 0.0
        %698 = vmatpush1.msra.mxu0 0.0
        %699 = vmatprep.subr.mxu0 0.0
        %700 = vmatpush1.msra.mxu0 0.0
        %701 = vmatprep.subr.mxu0 0.0
        %702 = vmatpush1.msra.mxu0 0.0
        %703 = vmatprep.subr.mxu0 0.0
        %704 = vmatpush1.msra.mxu0 0.0
        %705 = vmatprep.subr.mxu0 0.0
        %706 = vmatpush1.msra.mxu0 0.0
        %707 = vmatprep.subr.mxu0 0.0
        %708 = vmatpush1.msra.mxu0 0.0
        %709 = vmatprep.subr.mxu0 0.0
        %710 = vmatpush1.msra.mxu0 %v603
        %711 = vmatprep.subr.mxu0 0.0
        %712 = vmatpush1.msra.mxu0 %v602
        %713 = vmatprep.subr.mxu0 0.0
        %714 = vmatpush1.msra.mxu0 %v601
        %715 = vmatprep.subr.mxu0 0.0
        %716 = vmatpush1.msra.mxu0 %v600
        %717 = vmatprep.subr.mxu0 0.0
        %718 = vmatpush2.msra.mxu0 0.0
        %719 = vmatprep.subr.mxu0 0.0
        %720 = vmatpush2.msra.mxu0 0.0
        %721 = vmatprep.subr.mxu0 0.0
        %722 = vmatpush2.msra.mxu0 0.0
        %723 = vmatprep.subr.mxu0 0.0
        %724 = vmatpush2.msra.mxu0 0.0
        %725 = vmatprep.subr.mxu0 0.0
        %726 = vmatpush2.msra.mxu0 0.0
        %727 = vmatprep.subr.mxu0 0.0
        %728 = vmatpush2.msra.mxu0 0.0
        %729 = vmatprep.subr.mxu0 0.0
        %730 = vmatpush2.msra.mxu0 0.0
        %731 = vmatprep.subr.mxu0 0.0
        %732 = vmatpush2.msra.mxu0 0.0
        %733 = vmatprep.subr.mxu0 0.0
        %734 = vmatpush2.msra.mxu0 0.0
        %735 = vmatprep.subr.mxu0 0.0
        %736 = vmatpush2.msra.mxu0 0.0
        %737 = vmatprep.subr.mxu0 0.0
        %738 = vmatpush2.msra.mxu0 0.0
        %739 = vmatprep.subr.mxu0 0.0
        %740 = vmatpush2.msra.mxu0 0.0
        %741 = vmatprep.subr.mxu0 0.0
        %742 = vmatpush2.msra.mxu0 0.0
        %743 = vmatprep.subr.mxu0 0.0
        %744 = vmatpush2.msra.mxu0 0.0
        %745 = vmatprep.subr.mxu0 0.0
        %746 = vmatpush2.msra.mxu0 0.0
        %747 = vmatprep.subr.mxu0 0.0
        %748 = vmatpush2.msra.mxu0 0.0
        %749 = vmatprep.mubr.f32.mxu0 0.0
        %750 = vmatmul.mubr.f32.gmra.mxu0 %v662
        %v751 = vpop.f32.mrf.mxu0
        %v752 = vadd.f32 %v623, %v751
        %v753 = vpop.f32.mrf.mxu0
        %754 = vmatprep.mubr.f32.mxu0 0.0
        %755 = vmatmul.mubr.f32.gmra.mxu0 %v665
        %v756 = vpop.f32.mrf.mxu0
        %v757 = vadd.f32 %v628, %v756
        %v758 = vpop.f32.mrf.mxu0
        %759 = vmatprep.mubr.f32.mxu0 0.0
        %760 = vmatmul.mubr.f32.gmra.mxu0 %v668
        %v761 = vpop.f32.mrf.mxu0
        %v762 = vadd.f32 %v633, %v761
        %v763 = vpop.f32.mrf.mxu0
        %764 = vmatprep.mubr.f32.mxu0 0.0
        %765 = vmatmul.mubr.f32.gmra.mxu0 %v671
        %v766 = vpop.f32.mrf.mxu0
        %v767 = vadd.f32 %v638, %v766
        %v768 = vpop.f32.mrf.mxu0
        %769 = vmatprep.mubr.f32.mxu0 0.0
        %770 = vmatmul.mubr.f32.gmra.mxu0 %v674
        %v771 = vpop.f32.mrf.mxu0
        %v772 = vadd.f32 %v643, %v771
        %v773 = vpop.f32.mrf.mxu0
        %774 = vmatprep.mubr.f32.mxu0 0.0
        %775 = vmatmul.mubr.f32.gmra.mxu0 %v677
        %v776 = vpop.f32.mrf.mxu0
        %v777 = vadd.f32 %v648, %v776
        %v778 = vpop.f32.mrf.mxu0
        %779 = vmatprep.mubr.f32.mxu0 0.0
        %780 = vmatmul.mubr.f32.gmra.mxu0 %v680
        %v781 = vpop.f32.mrf.mxu0
        %v782 = vadd.f32 %v653, %v781
        %v783 = vpop.f32.mrf.mxu0
        %784 = vmatprep.mubr.f32.mxu0 0.0
        %785 = vmatmul.mubr.f32.gmra.mxu0 %v683
        %v786 = vpop.f32.mrf.mxu0
        %v787 = vadd.f32 %v658, %v786
        %v788 = vpop.f32.mrf.mxu0
        %789 = vdwg.mxu0
        %v790 = vmax.f32 %v752, 0.0
        %v791 = vmax.f32 %v757, 0.0
        %v792 = vmax.f32 %v762, 0.0
        %v793 = vmax.f32 %v767, 0.0
        %v794 = vmax.f32 %v772, 0.0
        %v795 = vmax.f32 %v777, 0.0
        %v796 = vmax.f32 %v782, 0.0
        %v797 = vmax.f32 %v787, 0.0
        %v798 = vld [vmem:[#allocation2] sm:$0xff]
        %v799 = vld [vmem:[#allocation2 + $0x8] sm:$0xff]
        %v800 = vld [vmem:[#allocation2 + $0x10] sm:$0xff]
        %v801 = vld [vmem:[#allocation2 + $0x18] sm:$0xff]
        %v802 = vld [vmem:[#allocation2 + $0x20] sm:$0xff]
        %v803 = vld [vmem:[#allocation2 + $0x28] sm:$0xff]
        %v804 = vld [vmem:[#allocation2 + $0x30] sm:$0xff]
        %v805 = vld [vmem:[#allocation2 + $0x38] sm:$0xff]
        %v806 = vsel %vm502, %v790, -inf
        %807 = vmax.xlane.f32.xlu0 %v806
        %v808 = vpop.xlane.xlu0 %807
        %v809 = vsel %vm502, %v791, -inf
        %810 = vmax.xlane.f32.xlu0 %v809
        %v811 = vpop.xlane.xlu0 %810
        %v812 = vsel %vm502, %v792, -inf
        %813 = vmax.xlane.f32.xlu0 %v812
        %v814 = vpop.xlane.xlu0 %813
        %v815 = vsel %vm502, %v793, -inf
        %816 = vmax.xlane.f32.xlu0 %v815
        %v817 = vpop.xlane.xlu0 %816
        %v818 = vsel %vm502, %v794, -inf
        %819 = vmax.xlane.f32.xlu0 %v818
        %v820 = vpop.xlane.xlu0 %819
        %v821 = vsel %vm502, %v795, -inf
        %822 = vmax.xlane.f32.xlu0 %v821
        %v823 = vpop.xlane.xlu0 %822
        %v824 = vsel %vm502, %v796, -inf
        %825 = vmax.xlane.f32.xlu0 %v824
        %v826 = vpop.xlane.xlu0 %825
        %v827 = vsel %vm502, %v797, -inf
        %828 = vmax.xlane.f32.xlu0 %v827
        %v829 = vpop.xlane.xlu0 %828
        %v830 = vmax.f32 %v798, %v808
        %v831 = vmax.f32 %v799, %v811
        %v832 = vmax.f32 %v800, %v814
        %v833 = vmax.f32 %v801, %v817
        %v834 = vmax.f32 %v802, %v820
        %v835 = vmax.f32 %v803, %v823
        %v836 = vmax.f32 %v804, %v826
        %v837 = vmax.f32 %v805, %v829
        %vm838 = vcmask 7168
        %839 = vst.msk [vmem:[#allocation2] sm:$0xff] %vm838, %v830
        %840 = vst.msk [vmem:[#allocation2 + $0x8] sm:$0xff] %vm838, %v831
        %841 = vst.msk [vmem:[#allocation2 + $0x10] sm:$0xff] %vm838, %v832
        %842 = vst.msk [vmem:[#allocation2 + $0x18] sm:$0xff] %vm838, %v833
        %843 = vst.msk [vmem:[#allocation2 + $0x20] sm:$0xff] %vm838, %v834
        %844 = vst.msk [vmem:[#allocation2 + $0x28] sm:$0xff] %vm838, %v835
        %845 = vst.msk [vmem:[#allocation2 + $0x30] sm:$0xff] %vm838, %v836
        %846 = vst.msk [vmem:[#allocation2 + $0x38] sm:$0xff] %vm838, %v837
        // Predicated region
        $region69: #{_lambda_.2} parent=47 // pred_check
          %p847 = pneg %p358
        $region70: #{_lambda_.2} parent=47 // pred_check_branch
          %849 = sbr.rel (%p847) target = $region72
        $region71: #{_lambda_.2} parent=47 // pred_region
          %v850 = vld [vmem:[#allocation2] sm:$0xff]
          %v851 = vld [vmem:[#allocation2 + $0x8] sm:$0xff]
          %v852 = vld [vmem:[#allocation2 + $0x10] sm:$0xff]
          %v853 = vld [vmem:[#allocation2 + $0x18] sm:$0xff]
          %v854 = vld [vmem:[#allocation2 + $0x20] sm:$0xff]
          %v855 = vld [vmem:[#allocation2 + $0x28] sm:$0xff]
          %v856 = vld [vmem:[#allocation2 + $0x30] sm:$0xff]
          %v857 = vld [vmem:[#allocation2 + $0x38] sm:$0xff]
          %858 = vst.msk [vmem:[%s357] sm:$0xff] %vm838, %v850
          %859 = vst.msk [vmem:[%s357 + $0x8] sm:$0xff] %vm838, %v851
          %860 = vst.msk [vmem:[%s357 + $0x10] sm:$0xff] %vm838, %v852
          %861 = vst.msk [vmem:[%s357 + $0x18] sm:$0xff] %vm838, %v853
          %862 = vst.msk [vmem:[%s357 + $0x20] sm:$0xff] %vm838, %v854
          %863 = vst.msk [vmem:[%s357 + $0x28] sm:$0xff] %vm838, %v855
          %864 = vst.msk [vmem:[%s357 + $0x30] sm:$0xff] %vm838, %v856
          %865 = vst.msk [vmem:[%s357 + $0x38] sm:$0xff] %vm838, %v857
        $region72: #{_lambda_.2} parent=47 // pred_fallthru
          _
        %p866 = scmp.lt.s32.totalorder %s25, 1
        %s867 = scalar_select %p866, %s25, 1
        %s868 = smul.addr %s867, 8
        %s869 = smul.addr %s868, 8
        %s870 = scalar_lea.vmem %s7, %s869
        // Predicated region
        $region73: #{_lambda_.2} parent=47 // pred_check
          %p871 = pneg %p205
        $region74: #{_lambda_.2} parent=47 // pred_check_branch
          %873 = sbr.rel (%p871) target = $region76
        $region75: #{_lambda_.2} parent=47 // pred_region
          _
        $region76: #{_lambda_.2} parent=47 // pred_fallthru
          _
      $region48: #{_lambda_.2} parent=5 // pred_fallthru
        _
      %p874 = scmp.le.s32.totalorder 2, %s16
      // Predicated region
      $region77: #{_lambda_.2} parent=5 // pred_check
        %p875 = pneg %p874
      $region78: #{_lambda_.2} parent=5 // pred_check_branch
        %877 = sbr.rel (%p875) target = $region80
      $region79: #{_lambda_.2} parent=5 // pred_region
        %s878 = ssub.s32 %s16, 2
        // Predicated region
        $region81: #{_lambda_.2} parent=79 // pred_check
          %p879 = pneg %p211
        $region82: #{_lambda_.2} parent=79 // pred_check_branch
          %881 = sbr.rel (%p879) target = $region84
        $region83: #{_lambda_.2} parent=79 // pred_region
          %p882 = scmp.lt.s32.totalorder %s27, 1
          %s883 = scalar_select %p882, %s27, 1
          %s884 = smul.addr %s883, 8
          %s885 = smul.addr %s884, 8
          %s886 = scalar_lea.vmem %s7, %s885
        $region84: #{_lambda_.2} parent=79 // pred_fallthru
          _
      $region80: #{_lambda_.2} parent=5 // pred_fallthru
        _
    $region6: #{_lambda_.2} parent=1 // loop_footer
      %s20 = sadd.s32 1, %s16
    $region7: #{_lambda_.2} parent=1 // loop_footer_branch
      %15 = sbr.rel target = $region3
    $region8: #{_lambda_.2} parent=1 // loop_exit
      _
    %887 = vsyncpa [#allocation4], 1
    %s888 = scalar_lea.sflag [#allocation4], 1
    %889 = vsyncpa %s888, 1
    %890 = vsyncpa [#allocation6], 1
    %891 = vsyncpa [#allocation9], 1

// kernel: _lambda_.3
$region0: #{_lambda_.3}
  #allocation0 [shape = 'u32[]', space=smem, size = 0x4, offset = 0x4, fixed_abs, tag = 'smem constant byte address 0x4 - core index']
  #allocation1 [shape = 'u32[144,128]{1,0:T(1,128)}', space=vmem, size = 0x12000, scoped, tag = 'internal scratch']
  %s0 = inlined_call_operand.vmem [shape: f32[2,64], index: 0, kind: input, shape index: {}]
  %s1 = inlined_call_operand.vmem [shape: f32[64,32], index: 1, kind: input, shape index: {}]
  %s2 = inlined_call_operand.vmem [shape: f32[1,32], index: 2, kind: input, shape index: {}]
  %s3 = inlined_call_operand.vmem [shape: f32[32,8], index: 3, kind: input, shape index: {}]
  %s4 = inlined_call_operand.vmem [shape: f32[1,8], index: 4, kind: input, shape index: {}]
  %s5 = inlined_call_operand.vmem [shape: f32[32,8], index: 5, kind: input, shape index: {}]
  %s6 = inlined_call_operand.vmem [shape: f32[1,8], index: 6, kind: input, shape index: {}]
  %s7 = inlined_call_operand.vmem [shape: f32[8,32], index: 7, kind: input, shape index: {}]
  %s8 = inlined_call_operand.vmem [shape: f32[1,32], index: 8, kind: input, shape index: {}]
  %s9 = inlined_call_operand.vmem [shape: f32[32,64], index: 9, kind: input, shape index: {}]
  %s10 = inlined_call_operand.vmem [shape: f32[1,64], index: 10, kind: input, shape index: {}]
  %s11 = inlined_call_operand.vmem [shape: f32[64,24], index: 11, kind: input, shape index: {}]
  %s12 = inlined_call_operand.vmem [shape: f32[1,24], index: 12, kind: input, shape index: {}]
  %s13 = inlined_call_operand.vmem [shape: f32[8,32], index: 13, kind: input, shape index: {}]
  %s14 = inlined_call_operand.vmem [shape: f32[1,32], index: 14, kind: input, shape index: {}]
  %s15 = inlined_call_operand.vmem [shape: f32[32,64], index: 15, kind: input, shape index: {}]
  %s16 = inlined_call_operand.vmem [shape: f32[1,64], index: 16, kind: input, shape index: {}]
  %s17 = inlined_call_operand.vmem [shape: f32[64,24], index: 17, kind: input, shape index: {}]
  %s18 = inlined_call_operand.vmem [shape: f32[1,24], index: 18, kind: input, shape index: {}]
  %s19 = inlined_call_operand.vmem [shape: f32[2,24], index: 19, kind: output, shape index: {0}]
  %s20 = inlined_call_operand.vmem [shape: f32[2,24], index: 20, kind: output, shape index: {1}]
  %21 = xla_tuple %s19, %s20
  %s22 = sld [smem:[#allocation0]]
  $region94: #{_lambda_.3} parent=0
    _
  %s24 = ssub.s32 1, %s22
  %s25 = scalar_select 0, %s24, %s22
  // Predicated region
  $region2: #{_lambda_.3} parent=0 // pred_check
    _
  $region3: #{_lambda_.3} parent=0 // pred_check_branch
    %27 = sbr.rel (0) target = $region5
  $region4: #{_lambda_.3} parent=0 // pred_region
    _
  $region5: #{_lambda_.3} parent=0 // pred_fallthru
    _
  // Predicated region
  $region6: #{_lambda_.3} parent=0 // pred_check
    _
  $region7: #{_lambda_.3} parent=0 // pred_check_branch
    %29 = sbr.rel (0) target = $region9
  $region8: #{_lambda_.3} parent=0 // pred_region
    _
  $region9: #{_lambda_.3} parent=0 // pred_fallthru
    _
  // Predicated region
  $region10: #{_lambda_.3} parent=0 // pred_check
    _
  $region11: #{_lambda_.3} parent=0 // pred_check_branch
    %31 = sbr.rel (0) target = $region13
  $region12: #{_lambda_.3} parent=0 // pred_region
    _
  $region13: #{_lambda_.3} parent=0 // pred_fallthru
    _
  // Predicated region
  $region14: #{_lambda_.3} parent=0 // pred_check
    _
  $region15: #{_lambda_.3} parent=0 // pred_check_branch
    %33 = sbr.rel (0) target = $region17
  $region16: #{_lambda_.3} parent=0 // pred_region
    _
  $region17: #{_lambda_.3} parent=0 // pred_fallthru
    _
  // Predicated region
  $region18: #{_lambda_.3} parent=0 // pred_check
    _
  $region19: #{_lambda_.3} parent=0 // pred_check_branch
    %35 = sbr.rel (0) target = $region21
  $region20: #{_lambda_.3} parent=0 // pred_region
    _
  $region21: #{_lambda_.3} parent=0 // pred_fallthru
    _
  // Predicated region
  $region22: #{_lambda_.3} parent=0 // pred_check
    _
  $region23: #{_lambda_.3} parent=0 // pred_check_branch
    %37 = sbr.rel (0) target = $region25
  $region24: #{_lambda_.3} parent=0 // pred_region
    _
  $region25: #{_lambda_.3} parent=0 // pred_fallthru
    _
  // Predicated region
  $region26: #{_lambda_.3} parent=0 // pred_check
    _
  $region27: #{_lambda_.3} parent=0 // pred_check_branch
    %39 = sbr.rel (0) target = $region29
  $region28: #{_lambda_.3} parent=0 // pred_region
    _
  $region29: #{_lambda_.3} parent=0 // pred_fallthru
    _
  // Predicated region
  $region30: #{_lambda_.3} parent=0 // pred_check
    _
  $region31: #{_lambda_.3} parent=0 // pred_check_branch
    %41 = sbr.rel (0) target = $region33
  $region32: #{_lambda_.3} parent=0 // pred_region
    _
  $region33: #{_lambda_.3} parent=0 // pred_fallthru
    _
  // Predicated region
  $region34: #{_lambda_.3} parent=0 // pred_check
    _
  $region35: #{_lambda_.3} parent=0 // pred_check_branch
    %43 = sbr.rel (0) target = $region37
  $region36: #{_lambda_.3} parent=0 // pred_region
    _
  $region37: #{_lambda_.3} parent=0 // pred_fallthru
    _
  // Predicated region
  $region38: #{_lambda_.3} parent=0 // pred_check
    _
  $region39: #{_lambda_.3} parent=0 // pred_check_branch
    %45 = sbr.rel (0) target = $region41
  $region40: #{_lambda_.3} parent=0 // pred_region
    _
  $region41: #{_lambda_.3} parent=0 // pred_fallthru
    _
  // Predicated region
  $region42: #{_lambda_.3} parent=0 // pred_check
    _
  $region43: #{_lambda_.3} parent=0 // pred_check_branch
    %47 = sbr.rel (0) target = $region45
  $region44: #{_lambda_.3} parent=0 // pred_region
    _
  $region45: #{_lambda_.3} parent=0 // pred_fallthru
    _
  // Predicated region
  $region46: #{_lambda_.3} parent=0 // pred_check
    _
  $region47: #{_lambda_.3} parent=0 // pred_check_branch
    %49 = sbr.rel (0) target = $region49
  $region48: #{_lambda_.3} parent=0 // pred_region
    _
  $region49: #{_lambda_.3} parent=0 // pred_fallthru
    _
  // Predicated region
  $region50: #{_lambda_.3} parent=0 // pred_check
    _
  $region51: #{_lambda_.3} parent=0 // pred_check_branch
    %51 = sbr.rel (0) target = $region53
  $region52: #{_lambda_.3} parent=0 // pred_region
    _
  $region53: #{_lambda_.3} parent=0 // pred_fallthru
    _
  // Predicated region
  $region54: #{_lambda_.3} parent=0 // pred_check
    _
  $region55: #{_lambda_.3} parent=0 // pred_check_branch
    %53 = sbr.rel (0) target = $region57
  $region56: #{_lambda_.3} parent=0 // pred_region
    _
  $region57: #{_lambda_.3} parent=0 // pred_fallthru
    _
  // Predicated region
  $region58: #{_lambda_.3} parent=0 // pred_check
    _
  $region59: #{_lambda_.3} parent=0 // pred_check_branch
    %55 = sbr.rel (0) target = $region61
  $region60: #{_lambda_.3} parent=0 // pred_region
    _
  $region61: #{_lambda_.3} parent=0 // pred_fallthru
    _
  // Predicated region
  $region62: #{_lambda_.3} parent=0 // pred_check
    _
  $region63: #{_lambda_.3} parent=0 // pred_check_branch
    %57 = sbr.rel (0) target = $region65
  $region64: #{_lambda_.3} parent=0 // pred_region
    _
  $region65: #{_lambda_.3} parent=0 // pred_fallthru
    _
  // Predicated region
  $region66: #{_lambda_.3} parent=0 // pred_check
    _
  $region67: #{_lambda_.3} parent=0 // pred_check_branch
    %59 = sbr.rel (0) target = $region69
  $region68: #{_lambda_.3} parent=0 // pred_region
    _
  $region69: #{_lambda_.3} parent=0 // pred_fallthru
    _
  // Predicated region
  $region70: #{_lambda_.3} parent=0 // pred_check
    _
  $region71: #{_lambda_.3} parent=0 // pred_check_branch
    %61 = sbr.rel (0) target = $region73
  $region72: #{_lambda_.3} parent=0 // pred_region
    _
  $region73: #{_lambda_.3} parent=0 // pred_fallthru
    _
  // Predicated region
  $region74: #{_lambda_.3} parent=0 // pred_check
    _
  $region75: #{_lambda_.3} parent=0 // pred_check_branch
    %63 = sbr.rel (0) target = $region77
  $region76: #{_lambda_.3} parent=0 // pred_region
    _
  $region77: #{_lambda_.3} parent=0 // pred_fallthru
    _
  %v64 = vld [vmem:[%s0] sm:$0x3]
  %v65 = vld [vmem:[%s1] sm:$0xff]
  %v66 = vld [vmem:[%s1 + $0x8] sm:$0xff]
  %v67 = vld [vmem:[%s1 + $0x10] sm:$0xff]
  %v68 = vld [vmem:[%s1 + $0x18] sm:$0xff]
  %v69 = vld [vmem:[%s1 + $0x20] sm:$0xff]
  %v70 = vld [vmem:[%s1 + $0x28] sm:$0xff]
  %v71 = vld [vmem:[%s1 + $0x30] sm:$0xff]
  %v72 = vld [vmem:[%s1 + $0x38] sm:$0xff]
  %v73 = vld [vmem:[%s2] sm:$0x1]
  %v75 = vlaneseq
  %v76 = vshrl.u32 %v75, 7
  %v77 = vsub.s32 0, %v76
  %v78 = vrot.slane %v73, %v77
  %vm80 = vcmask 523264
  %v82 = vsel %vm80, %v64, 0
  %84 = vmatprep.subr.mxu0 0.0
  %85 = vmatpush1.msra.mxu0 0.0
  %86 = vmatprep.subr.mxu0 0.0
  %87 = vmatpush1.msra.mxu0 0.0
  %88 = vmatprep.subr.mxu0 0.0
  %89 = vmatpush1.msra.mxu0 0.0
  %90 = vmatprep.subr.mxu0 0.0
  %91 = vmatpush1.msra.mxu0 0.0
  %92 = vmatprep.subr.mxu0 0.0
  %93 = vmatpush1.msra.mxu0 0.0
  %94 = vmatprep.subr.mxu0 0.0
  %95 = vmatpush1.msra.mxu0 0.0
  %96 = vmatprep.subr.mxu0 0.0
  %97 = vmatpush1.msra.mxu0 0.0
  %98 = vmatprep.subr.mxu0 0.0
  %99 = vmatpush1.msra.mxu0 0.0
  %100 = vmatprep.subr.mxu0 0.0
  %101 = vmatpush1.msra.mxu0 %v72
  %102 = vmatprep.subr.mxu0 0.0
  %103 = vmatpush1.msra.mxu0 %v71
  %104 = vmatprep.subr.mxu0 0.0
  %105 = vmatpush1.msra.mxu0 %v70
  %106 = vmatprep.subr.mxu0 0.0
  %107 = vmatpush1.msra.mxu0 %v69
  %108 = vmatprep.subr.mxu0 0.0
  %109 = vmatpush1.msra.mxu0 %v68
  %110 = vmatprep.subr.mxu0 0.0
  %111 = vmatpush1.msra.mxu0 %v67
  %112 = vmatprep.subr.mxu0 0.0
  %113 = vmatpush1.msra.mxu0 %v66
  %114 = vmatprep.subr.mxu0 0.0
  %115 = vmatpush1.msra.mxu0 %v65
  %116 = vmatprep.subr.mxu0 0.0
  %117 = vmatpush2.msra.mxu0 0.0
  %118 = vmatprep.subr.mxu0 0.0
  %119 = vmatpush2.msra.mxu0 0.0
  %120 = vmatprep.subr.mxu0 0.0
  %121 = vmatpush2.msra.mxu0 0.0
  %122 = vmatprep.subr.mxu0 0.0
  %123 = vmatpush2.msra.mxu0 0.0
  %124 = vmatprep.subr.mxu0 0.0
  %125 = vmatpush2.msra.mxu0 0.0
  %126 = vmatprep.subr.mxu0 0.0
  %127 = vmatpush2.msra.mxu0 0.0
  %128 = vmatprep.subr.mxu0 0.0
  %129 = vmatpush2.msra.mxu0 0.0
  %130 = vmatprep.subr.mxu0 0.0
  %131 = vmatpush2.msra.mxu0 0.0
  %132 = vmatprep.subr.mxu0 0.0
  %133 = vmatpush2.msra.mxu0 0.0
  %134 = vmatprep.subr.mxu0 0.0
  %135 = vmatpush2.msra.mxu0 0.0
  %136 = vmatprep.subr.mxu0 0.0
  %137 = vmatpush2.msra.mxu0 0.0
  %138 = vmatprep.subr.mxu0 0.0
  %139 = vmatpush2.msra.mxu0 0.0
  %140 = vmatprep.subr.mxu0 0.0
  %141 = vmatpush2.msra.mxu0 0.0
  %142 = vmatprep.subr.mxu0 0.0
  %143 = vmatpush2.msra.mxu0 0.0
  %144 = vmatprep.subr.mxu0 0.0
  %145 = vmatpush2.msra.mxu0 0.0
  %146 = vmatprep.subr.mxu0 0.0
  %147 = vmatpush2.msra.mxu0 0.0
  %148 = vmatprep.mubr.f32.mxu0 0.0
  %149 = vmatmul.mubr.f32.gmra.mxu0 %v82
  %v150 = vpop.f32.mrf.mxu0
  %v151 = vadd.f32 %v78, %v150
  %v152 = vpop.f32.mrf.mxu0
  %153 = vdwg.mxu0
  %v154 = vmax.f32 %v151, 0.0
  %v155 = vld [vmem:[%s3] sm:$0xff]
  %v156 = vld [vmem:[%s3 + $0x8] sm:$0xff]
  %v157 = vld [vmem:[%s3 + $0x10] sm:$0xff]
  %v158 = vld [vmem:[%s3 + $0x18] sm:$0xff]
  %v159 = vld [vmem:[%s4] sm:$0x1]
  %v161 = vlaneseq
  %v162 = vshrl.u32 %v161, 7
  %v163 = vsub.s32 0, %v162
  %v164 = vrot.slane %v159, %v163
  %vm166 = vcmask 261120
  %v168 = vsel %vm166, %v154, 0
  %170 = vmatprep.subr.mxu0 0.0
  %171 = vmatpush1.msra.mxu0 0.0
  %172 = vmatprep.subr.mxu0 0.0
  %173 = vmatpush1.msra.mxu0 0.0
  %174 = vmatprep.subr.mxu0 0.0
  %175 = vmatpush1.msra.mxu0 0.0
  %176 = vmatprep.subr.mxu0 0.0
  %177 = vmatpush1.msra.mxu0 0.0
  %178 = vmatprep.subr.mxu0 0.0
  %179 = vmatpush1.msra.mxu0 0.0
  %180 = vmatprep.subr.mxu0 0.0
  %181 = vmatpush1.msra.mxu0 0.0
  %182 = vmatprep.subr.mxu0 0.0
  %183 = vmatpush1.msra.mxu0 0.0
  %184 = vmatprep.subr.mxu0 0.0
  %185 = vmatpush1.msra.mxu0 0.0
  %186 = vmatprep.subr.mxu0 0.0
  %187 = vmatpush1.msra.mxu0 0.0
  %188 = vmatprep.subr.mxu0 0.0
  %189 = vmatpush1.msra.mxu0 0.0
  %190 = vmatprep.subr.mxu0 0.0
  %191 = vmatpush1.msra.mxu0 0.0
  %192 = vmatprep.subr.mxu0 0.0
  %193 = vmatpush1.msra.mxu0 0.0
  %194 = vmatprep.subr.mxu0 0.0
  %195 = vmatpush1.msra.mxu0 %v158
  %196 = vmatprep.subr.mxu0 0.0
  %197 = vmatpush1.msra.mxu0 %v157
  %198 = vmatprep.subr.mxu0 0.0
  %199 = vmatpush1.msra.mxu0 %v156
  %200 = vmatprep.subr.mxu0 0.0
  %201 = vmatpush1.msra.mxu0 %v155
  %202 = vmatprep.subr.mxu0 0.0
  %203 = vmatpush2.msra.mxu0 0.0
  %204 = vmatprep.subr.mxu0 0.0
  %205 = vmatpush2.msra.mxu0 0.0
  %206 = vmatprep.subr.mxu0 0.0
  %207 = vmatpush2.msra.mxu0 0.0
  %208 = vmatprep.subr.mxu0 0.0
  %209 = vmatpush2.msra.mxu0 0.0
  %210 = vmatprep.subr.mxu0 0.0
  %211 = vmatpush2.msra.mxu0 0.0
  %212 = vmatprep.subr.mxu0 0.0
  %213 = vmatpush2.msra.mxu0 0.0
  %214 = vmatprep.subr.mxu0 0.0
  %215 = vmatpush2.msra.mxu0 0.0
  %216 = vmatprep.subr.mxu0 0.0
  %217 = vmatpush2.msra.mxu0 0.0
  %218 = vmatprep.subr.mxu0 0.0
  %219 = vmatpush2.msra.mxu0 0.0
  %220 = vmatprep.subr.mxu0 0.0
  %221 = vmatpush2.msra.mxu0 0.0
  %222 = vmatprep.subr.mxu0 0.0
  %223 = vmatpush2.msra.mxu0 0.0
  %224 = vmatprep.subr.mxu0 0.0
  %225 = vmatpush2.msra.mxu0 0.0
  %226 = vmatprep.subr.mxu0 0.0
  %227 = vmatpush2.msra.mxu0 0.0
  %228 = vmatprep.subr.mxu0 0.0
  %229 = vmatpush2.msra.mxu0 0.0
  %230 = vmatprep.subr.mxu0 0.0
  %231 = vmatpush2.msra.mxu0 0.0
  %232 = vmatprep.subr.mxu0 0.0
  %233 = vmatpush2.msra.mxu0 0.0
  %234 = vmatprep.mubr.f32.mxu0 0.0
  %235 = vmatmul.mubr.f32.gmra.mxu0 %v168
  %v236 = vpop.f32.mrf.mxu0
  %v237 = vadd.f32 %v164, %v236
  %v238 = vpop.f32.mrf.mxu0
  %239 = vdwg.mxu0
  %v240 = vld [vmem:[%s5] sm:$0xff]
  %v241 = vld [vmem:[%s5 + $0x8] sm:$0xff]
  %v242 = vld [vmem:[%s5 + $0x10] sm:$0xff]
  %v243 = vld [vmem:[%s5 + $0x18] sm:$0xff]
  %v244 = vld [vmem:[%s6] sm:$0x1]
  %v246 = vlaneseq
  %v247 = vshrl.u32 %v246, 7
  %v248 = vsub.s32 0, %v247
  %v249 = vrot.slane %v244, %v248
  %251 = vmatprep.subr.mxu0 0.0
  %252 = vmatpush1.msra.mxu0 0.0
  %253 = vmatprep.subr.mxu0 0.0
  %254 = vmatpush1.msra.mxu0 0.0
  %255 = vmatprep.subr.mxu0 0.0
  %256 = vmatpush1.msra.mxu0 0.0
  %257 = vmatprep.subr.mxu0 0.0
  %258 = vmatpush1.msra.mxu0 0.0
  %259 = vmatprep.subr.mxu0 0.0
  %260 = vmatpush1.msra.mxu0 0.0
  %261 = vmatprep.subr.mxu0 0.0
  %262 = vmatpush1.msra.mxu0 0.0
  %263 = vmatprep.subr.mxu0 0.0
  %264 = vmatpush1.msra.mxu0 0.0
  %265 = vmatprep.subr.mxu0 0.0
  %266 = vmatpush1.msra.mxu0 0.0
  %267 = vmatprep.subr.mxu0 0.0
  %268 = vmatpush1.msra.mxu0 0.0
  %269 = vmatprep.subr.mxu0 0.0
  %270 = vmatpush1.msra.mxu0 0.0
  %271 = vmatprep.subr.mxu0 0.0
  %272 = vmatpush1.msra.mxu0 0.0
  %273 = vmatprep.subr.mxu0 0.0
  %274 = vmatpush1.msra.mxu0 0.0
  %275 = vmatprep.subr.mxu0 0.0
  %276 = vmatpush1.msra.mxu0 %v243
  %277 = vmatprep.subr.mxu0 0.0
  %278 = vmatpush1.msra.mxu0 %v242
  %279 = vmatprep.subr.mxu0 0.0
  %280 = vmatpush1.msra.mxu0 %v241
  %281 = vmatprep.subr.mxu0 0.0
  %282 = vmatpush1.msra.mxu0 %v240
  %283 = vmatprep.subr.mxu0 0.0
  %284 = vmatpush2.msra.mxu0 0.0
  %285 = vmatprep.subr.mxu0 0.0
  %286 = vmatpush2.msra.mxu0 0.0
  %287 = vmatprep.subr.mxu0 0.0
  %288 = vmatpush2.msra.mxu0 0.0
  %289 = vmatprep.subr.mxu0 0.0
  %290 = vmatpush2.msra.mxu0 0.0
  %291 = vmatprep.subr.mxu0 0.0
  %292 = vmatpush2.msra.mxu0 0.0
  %293 = vmatprep.subr.mxu0 0.0
  %294 = vmatpush2.msra.mxu0 0.0
  %295 = vmatprep.subr.mxu0 0.0
  %296 = vmatpush2.msra.mxu0 0.0
  %297 = vmatprep.subr.mxu0 0.0
  %298 = vmatpush2.msra.mxu0 0.0
  %299 = vmatprep.subr.mxu0 0.0
  %300 = vmatpush2.msra.mxu0 0.0
  %301 = vmatprep.subr.mxu0 0.0
  %302 = vmatpush2.msra.mxu0 0.0
  %303 = vmatprep.subr.mxu0 0.0
  %304 = vmatpush2.msra.mxu0 0.0
  %305 = vmatprep.subr.mxu0 0.0
  %306 = vmatpush2.msra.mxu0 0.0
  %307 = vmatprep.subr.mxu0 0.0
  %308 = vmatpush2.msra.mxu0 0.0
  %309 = vmatprep.subr.mxu0 0.0
  %310 = vmatpush2.msra.mxu0 0.0
  %311 = vmatprep.subr.mxu0 0.0
  %312 = vmatpush2.msra.mxu0 0.0
  %313 = vmatprep.subr.mxu0 0.0
  %314 = vmatpush2.msra.mxu0 0.0
  %315 = vmatprep.mubr.f32.mxu0 0.0
  %316 = vmatmul.mubr.f32.gmra.mxu0 %v168
  %v317 = vpop.f32.mrf.mxu0
  %v318 = vadd.f32 %v249, %v317
  %v319 = vpop.f32.mrf.mxu0
  %320 = vdwg.mxu0
  %v321 = vld [vmem:[%s7] sm:$0xff]
  %v322 = vld [vmem:[%s8] sm:$0x1]
  %v324 = vlaneseq
  %v325 = vshrl.u32 %v324, 7
  %v326 = vsub.s32 0, %v325
  %v327 = vrot.slane %v322, %v326
  %vm329 = vcmask 64512
  %v331 = vsel %vm329, %v237, 0
  %333 = vmatprep.subr.mxu0 0.0
  %334 = vmatpush1.msra.mxu0 0.0
  %335 = vmatprep.subr.mxu0 0.0
  %336 = vmatpush1.msra.mxu0 0.0
  %337 = vmatprep.subr.mxu0 0.0
  %338 = vmatpush1.msra.mxu0 0.0
  %339 = vmatprep.subr.mxu0 0.0
  %340 = vmatpush1.msra.mxu0 0.0
  %341 = vmatprep.subr.mxu0 0.0
  %342 = vmatpush1.msra.mxu0 0.0
  %343 = vmatprep.subr.mxu0 0.0
  %344 = vmatpush1.msra.mxu0 0.0
  %345 = vmatprep.subr.mxu0 0.0
  %346 = vmatpush1.msra.mxu0 0.0
  %347 = vmatprep.subr.mxu0 0.0
  %348 = vmatpush1.msra.mxu0 0.0
  %349 = vmatprep.subr.mxu0 0.0
  %350 = vmatpush1.msra.mxu0 0.0
  %351 = vmatprep.subr.mxu0 0.0
  %352 = vmatpush1.msra.mxu0 0.0
  %353 = vmatprep.subr.mxu0 0.0
  %354 = vmatpush1.msra.mxu0 0.0
  %355 = vmatprep.subr.mxu0 0.0
  %356 = vmatpush1.msra.mxu0 0.0
  %357 = vmatprep.subr.mxu0 0.0
  %358 = vmatpush1.msra.mxu0 0.0
  %359 = vmatprep.subr.mxu0 0.0
  %360 = vmatpush1.msra.mxu0 0.0
  %361 = vmatprep.subr.mxu0 0.0
  %362 = vmatpush1.msra.mxu0 0.0
  %363 = vmatprep.subr.mxu0 0.0
  %364 = vmatpush1.msra.mxu0 %v321
  %365 = vmatprep.subr.mxu0 0.0
  %366 = vmatpush2.msra.mxu0 0.0
  %367 = vmatprep.subr.mxu0 0.0
  %368 = vmatpush2.msra.mxu0 0.0
  %369 = vmatprep.subr.mxu0 0.0
  %370 = vmatpush2.msra.mxu0 0.0
  %371 = vmatprep.subr.mxu0 0.0
  %372 = vmatpush2.msra.mxu0 0.0
  %373 = vmatprep.subr.mxu0 0.0
  %374 = vmatpush2.msra.mxu0 0.0
  %375 = vmatprep.subr.mxu0 0.0
  %376 = vmatpush2.msra.mxu0 0.0
  %377 = vmatprep.subr.mxu0 0.0
  %378 = vmatpush2.msra.mxu0 0.0
  %379 = vmatprep.subr.mxu0 0.0
  %380 = vmatpush2.msra.mxu0 0.0
  %381 = vmatprep.subr.mxu0 0.0
  %382 = vmatpush2.msra.mxu0 0.0
  %383 = vmatprep.subr.mxu0 0.0
  %384 = vmatpush2.msra.mxu0 0.0
  %385 = vmatprep.subr.mxu0 0.0
  %386 = vmatpush2.msra.mxu0 0.0
  %387 = vmatprep.subr.mxu0 0.0
  %388 = vmatpush2.msra.mxu0 0.0
  %389 = vmatprep.subr.mxu0 0.0
  %390 = vmatpush2.msra.mxu0 0.0
  %391 = vmatprep.subr.mxu0 0.0
  %392 = vmatpush2.msra.mxu0 0.0
  %393 = vmatprep.subr.mxu0 0.0
  %394 = vmatpush2.msra.mxu0 0.0
  %395 = vmatprep.subr.mxu0 0.0
  %396 = vmatpush2.msra.mxu0 0.0
  %397 = vmatprep.mubr.f32.mxu0 0.0
  %398 = vmatmul.mubr.f32.gmra.mxu0 %v331
  %v399 = vpop.f32.mrf.mxu0
  %v400 = vadd.f32 %v327, %v399
  %v401 = vpop.f32.mrf.mxu0
  %402 = vdwg.mxu0
  %v403 = vmax.f32 %v400, 0.0
  %v404 = vld [vmem:[%s9] sm:$0xff]
  %v405 = vld [vmem:[%s9 + $0x8] sm:$0xff]
  %v406 = vld [vmem:[%s9 + $0x10] sm:$0xff]
  %v407 = vld [vmem:[%s9 + $0x18] sm:$0xff]
  %v408 = vld [vmem:[%s10] sm:$0x1]
  %v410 = vlaneseq
  %v411 = vshrl.u32 %v410, 7
  %v412 = vsub.s32 0, %v411
  %v413 = vrot.slane %v408, %v412
  %v416 = vsel %vm166, %v403, 0
  %418 = vmatprep.subr.mxu0 0.0
  %419 = vmatpush1.msra.mxu0 0.0
  %420 = vmatprep.subr.mxu0 0.0
  %421 = vmatpush1.msra.mxu0 0.0
  %422 = vmatprep.subr.mxu0 0.0
  %423 = vmatpush1.msra.mxu0 0.0
  %424 = vmatprep.subr.mxu0 0.0
  %425 = vmatpush1.msra.mxu0 0.0
  %426 = vmatprep.subr.mxu0 0.0
  %427 = vmatpush1.msra.mxu0 0.0
  %428 = vmatprep.subr.mxu0 0.0
  %429 = vmatpush1.msra.mxu0 0.0
  %430 = vmatprep.subr.mxu0 0.0
  %431 = vmatpush1.msra.mxu0 0.0
  %432 = vmatprep.subr.mxu0 0.0
  %433 = vmatpush1.msra.mxu0 0.0
  %434 = vmatprep.subr.mxu0 0.0
  %435 = vmatpush1.msra.mxu0 0.0
  %436 = vmatprep.subr.mxu0 0.0
  %437 = vmatpush1.msra.mxu0 0.0
  %438 = vmatprep.subr.mxu0 0.0
  %439 = vmatpush1.msra.mxu0 0.0
  %440 = vmatprep.subr.mxu0 0.0
  %441 = vmatpush1.msra.mxu0 0.0
  %442 = vmatprep.subr.mxu0 0.0
  %443 = vmatpush1.msra.mxu0 %v407
  %444 = vmatprep.subr.mxu0 0.0
  %445 = vmatpush1.msra.mxu0 %v406
  %446 = vmatprep.subr.mxu0 0.0
  %447 = vmatpush1.msra.mxu0 %v405
  %448 = vmatprep.subr.mxu0 0.0
  %449 = vmatpush1.msra.mxu0 %v404
  %450 = vmatprep.subr.mxu0 0.0
  %451 = vmatpush2.msra.mxu0 0.0
  %452 = vmatprep.subr.mxu0 0.0
  %453 = vmatpush2.msra.mxu0 0.0
  %454 = vmatprep.subr.mxu0 0.0
  %455 = vmatpush2.msra.mxu0 0.0
  %456 = vmatprep.subr.mxu0 0.0
  %457 = vmatpush2.msra.mxu0 0.0
  %458 = vmatprep.subr.mxu0 0.0
  %459 = vmatpush2.msra.mxu0 0.0
  %460 = vmatprep.subr.mxu0 0.0
  %461 = vmatpush2.msra.mxu0 0.0
  %462 = vmatprep.subr.mxu0 0.0
  %463 = vmatpush2.msra.mxu0 0.0
  %464 = vmatprep.subr.mxu0 0.0
  %465 = vmatpush2.msra.mxu0 0.0
  %466 = vmatprep.subr.mxu0 0.0
  %467 = vmatpush2.msra.mxu0 0.0
  %468 = vmatprep.subr.mxu0 0.0
  %469 = vmatpush2.msra.mxu0 0.0
  %470 = vmatprep.subr.mxu0 0.0
  %471 = vmatpush2.msra.mxu0 0.0
  %472 = vmatprep.subr.mxu0 0.0
  %473 = vmatpush2.msra.mxu0 0.0
  %474 = vmatprep.subr.mxu0 0.0
  %475 = vmatpush2.msra.mxu0 0.0
  %476 = vmatprep.subr.mxu0 0.0
  %477 = vmatpush2.msra.mxu0 0.0
  %478 = vmatprep.subr.mxu0 0.0
  %479 = vmatpush2.msra.mxu0 0.0
  %480 = vmatprep.subr.mxu0 0.0
  %481 = vmatpush2.msra.mxu0 0.0
  %482 = vmatprep.mubr.f32.mxu0 0.0
  %483 = vmatmul.mubr.f32.gmra.mxu0 %v416
  %v484 = vpop.f32.mrf.mxu0
  %v485 = vadd.f32 %v413, %v484
  %v486 = vpop.f32.mrf.mxu0
  %487 = vdwg.mxu0
  %v488 = vmax.f32 %v485, 0.0
  %v489 = vld [vmem:[%s11] sm:$0xff]
  %v490 = vld [vmem:[%s11 + $0x8] sm:$0xff]
  %v491 = vld [vmem:[%s11 + $0x10] sm:$0xff]
  %v492 = vld [vmem:[%s11 + $0x18] sm:$0xff]
  %v493 = vld [vmem:[%s11 + $0x20] sm:$0xff]
  %v494 = vld [vmem:[%s11 + $0x28] sm:$0xff]
  %v495 = vld [vmem:[%s11 + $0x30] sm:$0xff]
  %v496 = vld [vmem:[%s11 + $0x38] sm:$0xff]
  %v497 = vld [vmem:[%s12] sm:$0x1]
  %v499 = vlaneseq
  %v500 = vshrl.u32 %v499, 7
  %v501 = vsub.s32 0, %v500
  %v502 = vrot.slane %v497, %v501
  %v505 = vsel %vm80, %v488, 0
  %507 = vmatprep.subr.mxu0 0.0
  %508 = vmatpush1.msra.mxu0 0.0
  %509 = vmatprep.subr.mxu0 0.0
  %510 = vmatpush1.msra.mxu0 0.0
  %511 = vmatprep.subr.mxu0 0.0
  %512 = vmatpush1.msra.mxu0 0.0
  %513 = vmatprep.subr.mxu0 0.0
  %514 = vmatpush1.msra.mxu0 0.0
  %515 = vmatprep.subr.mxu0 0.0
  %516 = vmatpush1.msra.mxu0 0.0
  %517 = vmatprep.subr.mxu0 0.0
  %518 = vmatpush1.msra.mxu0 0.0
  %519 = vmatprep.subr.mxu0 0.0
  %520 = vmatpush1.msra.mxu0 0.0
  %521 = vmatprep.subr.mxu0 0.0
  %522 = vmatpush1.msra.mxu0 0.0
  %523 = vmatprep.subr.mxu0 0.0
  %524 = vmatpush1.msra.mxu0 %v496
  %525 = vmatprep.subr.mxu0 0.0
  %526 = vmatpush1.msra.mxu0 %v495
  %527 = vmatprep.subr.mxu0 0.0
  %528 = vmatpush1.msra.mxu0 %v494
  %529 = vmatprep.subr.mxu0 0.0
  %530 = vmatpush1.msra.mxu0 %v493
  %531 = vmatprep.subr.mxu0 0.0
  %532 = vmatpush1.msra.mxu0 %v492
  %533 = vmatprep.subr.mxu0 0.0
  %534 = vmatpush1.msra.mxu0 %v491
  %535 = vmatprep.subr.mxu0 0.0
  %536 = vmatpush1.msra.mxu0 %v490
  %537 = vmatprep.subr.mxu0 0.0
  %538 = vmatpush1.msra.mxu0 %v489
  %539 = vmatprep.subr.mxu0 0.0
  %540 = vmatpush2.msra.mxu0 0.0
  %541 = vmatprep.subr.mxu0 0.0
  %542 = vmatpush2.msra.mxu0 0.0
  %543 = vmatprep.subr.mxu0 0.0
  %544 = vmatpush2.msra.mxu0 0.0
  %545 = vmatprep.subr.mxu0 0.0
  %546 = vmatpush2.msra.mxu0 0.0
  %547 = vmatprep.subr.mxu0 0.0
  %548 = vmatpush2.msra.mxu0 0.0
  %549 = vmatprep.subr.mxu0 0.0
  %550 = vmatpush2.msra.mxu0 0.0
  %551 = vmatprep.subr.mxu0 0.0
  %552 = vmatpush2.msra.mxu0 0.0
  %553 = vmatprep.subr.mxu0 0.0
  %554 = vmatpush2.msra.mxu0 0.0
  %555 = vmatprep.subr.mxu0 0.0
  %556 = vmatpush2.msra.mxu0 0.0
  %557 = vmatprep.subr.mxu0 0.0
  %558 = vmatpush2.msra.mxu0 0.0
  %559 = vmatprep.subr.mxu0 0.0
  %560 = vmatpush2.msra.mxu0 0.0
  %561 = vmatprep.subr.mxu0 0.0
  %562 = vmatpush2.msra.mxu0 0.0
  %563 = vmatprep.subr.mxu0 0.0
  %564 = vmatpush2.msra.mxu0 0.0
  %565 = vmatprep.subr.mxu0 0.0
  %566 = vmatpush2.msra.mxu0 0.0
  %567 = vmatprep.subr.mxu0 0.0
  %568 = vmatpush2.msra.mxu0 0.0
  %569 = vmatprep.subr.mxu0 0.0
  %570 = vmatpush2.msra.mxu0 0.0
  %571 = vmatprep.mubr.f32.mxu0 0.0
  %572 = vmatmul.mubr.f32.gmra.mxu0 %v505
  %v573 = vpop.f32.mrf.mxu0
  %v574 = vadd.f32 %v502, %v573
  %v575 = vpop.f32.mrf.mxu0
  %576 = vdwg.mxu0
  %vm577 = vcmask 189440
  %578 = vst.msk [vmem:[%s19] sm:$0x3] %vm577, %v574
  %v579 = vld [vmem:[%s13] sm:$0xff]
  %v580 = vld [vmem:[%s14] sm:$0x1]
  %v582 = vlaneseq
  %v583 = vshrl.u32 %v582, 7
  %v584 = vsub.s32 0, %v583
  %v585 = vrot.slane %v580, %v584
  %v588 = vsel %vm329, %v318, 0
  %590 = vmatprep.subr.mxu0 0.0
  %591 = vmatpush1.msra.mxu0 0.0
  %592 = vmatprep.subr.mxu0 0.0
  %593 = vmatpush1.msra.mxu0 0.0
  %594 = vmatprep.subr.mxu0 0.0
  %595 = vmatpush1.msra.mxu0 0.0
  %596 = vmatprep.subr.mxu0 0.0
  %597 = vmatpush1.msra.mxu0 0.0
  %598 = vmatprep.subr.mxu0 0.0
  %599 = vmatpush1.msra.mxu0 0.0
  %600 = vmatprep.subr.mxu0 0.0
  %601 = vmatpush1.msra.mxu0 0.0
  %602 = vmatprep.subr.mxu0 0.0
  %603 = vmatpush1.msra.mxu0 0.0
  %604 = vmatprep.subr.mxu0 0.0
  %605 = vmatpush1.msra.mxu0 0.0
  %606 = vmatprep.subr.mxu0 0.0
  %607 = vmatpush1.msra.mxu0 0.0
  %608 = vmatprep.subr.mxu0 0.0
  %609 = vmatpush1.msra.mxu0 0.0
  %610 = vmatprep.subr.mxu0 0.0
  %611 = vmatpush1.msra.mxu0 0.0
  %612 = vmatprep.subr.mxu0 0.0
  %613 = vmatpush1.msra.mxu0 0.0
  %614 = vmatprep.subr.mxu0 0.0
  %615 = vmatpush1.msra.mxu0 0.0
  %616 = vmatprep.subr.mxu0 0.0
  %617 = vmatpush1.msra.mxu0 0.0
  %618 = vmatprep.subr.mxu0 0.0
  %619 = vmatpush1.msra.mxu0 0.0
  %620 = vmatprep.subr.mxu0 0.0
  %621 = vmatpush1.msra.mxu0 %v579
  %622 = vmatprep.subr.mxu0 0.0
  %623 = vmatpush2.msra.mxu0 0.0
  %624 = vmatprep.subr.mxu0 0.0
  %625 = vmatpush2.msra.mxu0 0.0
  %626 = vmatprep.subr.mxu0 0.0
  %627 = vmatpush2.msra.mxu0 0.0
  %628 = vmatprep.subr.mxu0 0.0
  %629 = vmatpush2.msra.mxu0 0.0
  %630 = vmatprep.subr.mxu0 0.0
  %631 = vmatpush2.msra.mxu0 0.0
  %632 = vmatprep.subr.mxu0 0.0
  %633 = vmatpush2.msra.mxu0 0.0
  %634 = vmatprep.subr.mxu0 0.0
  %635 = vmatpush2.msra.mxu0 0.0
  %636 = vmatprep.subr.mxu0 0.0
  %637 = vmatpush2.msra.mxu0 0.0
  %638 = vmatprep.subr.mxu0 0.0
  %639 = vmatpush2.msra.mxu0 0.0
  %640 = vmatprep.subr.mxu0 0.0
  %641 = vmatpush2.msra.mxu0 0.0
  %642 = vmatprep.subr.mxu0 0.0
  %643 = vmatpush2.msra.mxu0 0.0
  %644 = vmatprep.subr.mxu0 0.0
  %645 = vmatpush2.msra.mxu0 0.0
  %646 = vmatprep.subr.mxu0 0.0
  %647 = vmatpush2.msra.mxu0 0.0
  %648 = vmatprep.subr.mxu0 0.0
  %649 = vmatpush2.msra.mxu0 0.0
  %650 = vmatprep.subr.mxu0 0.0
  %651 = vmatpush2.msra.mxu0 0.0
  %652 = vmatprep.subr.mxu0 0.0
  %653 = vmatpush2.msra.mxu0 0.0
  %654 = vmatprep.mubr.f32.mxu0 0.0
  %655 = vmatmul.mubr.f32.gmra.mxu0 %v588
  %v656 = vpop.f32.mrf.mxu0
  %v657 = vadd.f32 %v585, %v656
  %v658 = vpop.f32.mrf.mxu0
  %659 = vdwg.mxu0
  %v660 = vmax.f32 %v657, 0.0
  %v661 = vld [vmem:[%s15] sm:$0xff]
  %v662 = vld [vmem:[%s15 + $0x8] sm:$0xff]
  %v663 = vld [vmem:[%s15 + $0x10] sm:$0xff]
  %v664 = vld [vmem:[%s15 + $0x18] sm:$0xff]
  %v665 = vld [vmem:[%s16] sm:$0x1]
  %v667 = vlaneseq
  %v668 = vshrl.u32 %v667, 7
  %v669 = vsub.s32 0, %v668
  %v670 = vrot.slane %v665, %v669
  %v673 = vsel %vm166, %v660, 0
  %675 = vmatprep.subr.mxu0 0.0
  %676 = vmatpush1.msra.mxu0 0.0
  %677 = vmatprep.subr.mxu0 0.0
  %678 = vmatpush1.msra.mxu0 0.0
  %679 = vmatprep.subr.mxu0 0.0
  %680 = vmatpush1.msra.mxu0 0.0
  %681 = vmatprep.subr.mxu0 0.0
  %682 = vmatpush1.msra.mxu0 0.0
  %683 = vmatprep.subr.mxu0 0.0
  %684 = vmatpush1.msra.mxu0 0.0
  %685 = vmatprep.subr.mxu0 0.0
  %686 = vmatpush1.msra.mxu0 0.0
  %687 = vmatprep.subr.mxu0 0.0
  %688 = vmatpush1.msra.mxu0 0.0
  %689 = vmatprep.subr.mxu0 0.0
  %690 = vmatpush1.msra.mxu0 0.0
  %691 = vmatprep.subr.mxu0 0.0
  %692 = vmatpush1.msra.mxu0 0.0
  %693 = vmatprep.subr.mxu0 0.0
  %694 = vmatpush1.msra.mxu0 0.0
  %695 = vmatprep.subr.mxu0 0.0
  %696 = vmatpush1.msra.mxu0 0.0
  %697 = vmatprep.subr.mxu0 0.0
  %698 = vmatpush1.msra.mxu0 0.0
  %699 = vmatprep.subr.mxu0 0.0
  %700 = vmatpush1.msra.mxu0 %v664
  %701 = vmatprep.subr.mxu0 0.0
  %702 = vmatpush1.msra.mxu0 %v663
  %703 = vmatprep.subr.mxu0 0.0
  %704 = vmatpush1.msra.mxu0 %v662
  %705 = vmatprep.subr.mxu0 0.0
  %706 = vmatpush1.msra.mxu0 %v661
  %707 = vmatprep.subr.mxu0 0.0
  %708 = vmatpush2.msra.mxu0 0.0
  %709 = vmatprep.subr.mxu0 0.0
  %710 = vmatpush2.msra.mxu0 0.0
  %711 = vmatprep.subr.mxu0 0.0
  %712 = vmatpush2.msra.mxu0 0.0
  %713 = vmatprep.subr.mxu0 0.0
  %714 = vmatpush2.msra.mxu0 0.0
  %715 = vmatprep.subr.mxu0 0.0
  %716 = vmatpush2.msra.mxu0 0.0
  %717 = vmatprep.subr.mxu0 0.0
  %718 = vmatpush2.msra.mxu0 0.0
  %719 = vmatprep.subr.mxu0 0.0
  %720 = vmatpush2.msra.mxu0 0.0
  %721 = vmatprep.subr.mxu0 0.0
  %722 = vmatpush2.msra.mxu0 0.0
  %723 = vmatprep.subr.mxu0 0.0
  %724 = vmatpush2.msra.mxu0 0.0
  %725 = vmatprep.subr.mxu0 0.0
  %726 = vmatpush2.msra.mxu0 0.0
  %727 = vmatprep.subr.mxu0 0.0
  %728 = vmatpush2.msra.mxu0 0.0
  %729 = vmatprep.subr.mxu0 0.0
  %730 = vmatpush2.msra.mxu0 0.0
  %731 = vmatprep.subr.mxu0 0.0
  %732 = vmatpush2.msra.mxu0 0.0
  %733 = vmatprep.subr.mxu0 0.0
  %734 = vmatpush2.msra.mxu0 0.0
  %735 = vmatprep.subr.mxu0 0.0
  %736 = vmatpush2.msra.mxu0 0.0
  %737 = vmatprep.subr.mxu0 0.0
  %738 = vmatpush2.msra.mxu0 0.0
  %739 = vmatprep.mubr.f32.mxu0 0.0
  %740 = vmatmul.mubr.f32.gmra.mxu0 %v673
  %v741 = vpop.f32.mrf.mxu0
  %v742 = vadd.f32 %v670, %v741
  %v743 = vpop.f32.mrf.mxu0
  %744 = vdwg.mxu0
  %v745 = vmax.f32 %v742, 0.0
  %v746 = vld [vmem:[%s17] sm:$0xff]
  %v747 = vld [vmem:[%s17 + $0x8] sm:$0xff]
  %v748 = vld [vmem:[%s17 + $0x10] sm:$0xff]
  %v749 = vld [vmem:[%s17 + $0x18] sm:$0xff]
  %v750 = vld [vmem:[%s17 + $0x20] sm:$0xff]
  %v751 = vld [vmem:[%s17 + $0x28] sm:$0xff]
  %v752 = vld [vmem:[%s17 + $0x30] sm:$0xff]
  %v753 = vld [vmem:[%s17 + $0x38] sm:$0xff]
  %v754 = vld [vmem:[%s18] sm:$0x1]
  %v756 = vlaneseq
  %v757 = vshrl.u32 %v756, 7
  %v758 = vsub.s32 0, %v757
  %v759 = vrot.slane %v754, %v758
  %v762 = vsel %vm80, %v745, 0
  %764 = vmatprep.subr.mxu0 0.0
  %765 = vmatpush1.msra.mxu0 0.0
  %766 = vmatprep.subr.mxu0 0.0
  %767 = vmatpush1.msra.mxu0 0.0
  %768 = vmatprep.subr.mxu0 0.0
  %769 = vmatpush1.msra.mxu0 0.0
  %770 = vmatprep.subr.mxu0 0.0
  %771 = vmatpush1.msra.mxu0 0.0
  %772 = vmatprep.subr.mxu0 0.0
  %773 = vmatpush1.msra.mxu0 0.0
  %774 = vmatprep.subr.mxu0 0.0
  %775 = vmatpush1.msra.mxu0 0.0
  %776 = vmatprep.subr.mxu0 0.0
  %777 = vmatpush1.msra.mxu0 0.0
  %778 = vmatprep.subr.mxu0 0.0
  %779 = vmatpush1.msra.mxu0 0.0
  %780 = vmatprep.subr.mxu0 0.0
  %781 = vmatpush1.msra.mxu0 %v753
  %782 = vmatprep.subr.mxu0 0.0
  %783 = vmatpush1.msra.mxu0 %v752
  %784 = vmatprep.subr.mxu0 0.0
  %785 = vmatpush1.msra.mxu0 %v751
  %786 = vmatprep.subr.mxu0 0.0
  %787 = vmatpush1.msra.mxu0 %v750
  %788 = vmatprep.subr.mxu0 0.0
  %789 = vmatpush1.msra.mxu0 %v749
  %790 = vmatprep.subr.mxu0 0.0
  %791 = vmatpush1.msra.mxu0 %v748
  %792 = vmatprep.subr.mxu0 0.0
  %793 = vmatpush1.msra.mxu0 %v747
  %794 = vmatprep.subr.mxu0 0.0
  %795 = vmatpush1.msra.mxu0 %v746
  %796 = vmatprep.subr.mxu0 0.0
  %797 = vmatpush2.msra.mxu0 0.0
  %798 = vmatprep.subr.mxu0 0.0
  %799 = vmatpush2.msra.mxu0 0.0
  %800 = vmatprep.subr.mxu0 0.0
  %801 = vmatpush2.msra.mxu0 0.0
  %802 = vmatprep.subr.mxu0 0.0
  %803 = vmatpush2.msra.mxu0 0.0
  %804 = vmatprep.subr.mxu0 0.0
  %805 = vmatpush2.msra.mxu0 0.0
  %806 = vmatprep.subr.mxu0 0.0
  %807 = vmatpush2.msra.mxu0 0.0
  %808 = vmatprep.subr.mxu0 0.0
  %809 = vmatpush2.msra.mxu0 0.0
  %810 = vmatprep.subr.mxu0 0.0
  %811 = vmatpush2.msra.mxu0 0.0
  %812 = vmatprep.subr.mxu0 0.0
  %813 = vmatpush2.msra.mxu0 0.0
  %814 = vmatprep.subr.mxu0 0.0
  %815 = vmatpush2.msra.mxu0 0.0
  %816 = vmatprep.subr.mxu0 0.0
  %817 = vmatpush2.msra.mxu0 0.0
  %818 = vmatprep.subr.mxu0 0.0
  %819 = vmatpush2.msra.mxu0 0.0
  %820 = vmatprep.subr.mxu0 0.0
  %821 = vmatpush2.msra.mxu0 0.0
  %822 = vmatprep.subr.mxu0 0.0
  %823 = vmatpush2.msra.mxu0 0.0
  %824 = vmatprep.subr.mxu0 0.0
  %825 = vmatpush2.msra.mxu0 0.0
  %826 = vmatprep.subr.mxu0 0.0
  %827 = vmatpush2.msra.mxu0 0.0
  %828 = vmatprep.mubr.f32.mxu0 0.0
  %829 = vmatmul.mubr.f32.gmra.mxu0 %v762
  %v830 = vpop.f32.mrf.mxu0
  %v831 = vadd.f32 %v759, %v830
  %v832 = vpop.f32.mrf.mxu0
  %833 = vdwg.mxu0
  %834 = vst.msk [vmem:[%s20] sm:$0x3] %vm577, %v831
  // Predicated region
  $region78: #{_lambda_.3} parent=0 // pred_check
    _
  $region79: #{_lambda_.3} parent=0 // pred_check_branch
    %836 = sbr.rel (0) target = $region81
  $region80: #{_lambda_.3} parent=0 // pred_region
    _
  $region81: #{_lambda_.3} parent=0 // pred_fallthru
    _
  // Predicated region
  $region82: #{_lambda_.3} parent=0 // pred_check
    _
  $region83: #{_lambda_.3} parent=0 // pred_check_branch
    %838 = sbr.rel (0) target = $region85
  $region84: #{_lambda_.3} parent=0 // pred_region
    _
  $region85: #{_lambda_.3} parent=0 // pred_fallthru
    _
  // Predicated region
  $region86: #{_lambda_.3} parent=0 // pred_check
    _
  $region87: #{_lambda_.3} parent=0 // pred_check_branch
    %840 = sbr.rel (0) target = $region89
  $region88: #{_lambda_.3} parent=0 // pred_region
    _
  $region89: #{_lambda_.3} parent=0 // pred_fallthru
    _
  // Predicated region
  $region90: #{_lambda_.3} parent=0 // pred_check
    _
  $region91: #{_lambda_.3} parent=0 // pred_check_branch
    %842 = sbr.rel (0) target = $region93
  $region92: #{_lambda_.3} parent=0 // pred_region
    _
  $region93: #{_lambda_.3} parent=0 // pred_fallthru
    _

</llo_original>
